<compile_context>
chip_gen: v7x
topology: tpu7x:2x2x1
jax: 0.10.0
libtpu: 0.0.40
codegen_flags: <defaults>
</compile_context>

<pallas_src>
import functools

import jax
import jax.numpy as jnp
from jax import lax
from jax.experimental import pallas as pl
from jax.experimental.pallas import tpu as pltpu


def _leaky(x, slope=0.2):
    return jnp.where(x >= 0, x, slope * x)


def _basic_block_kernel(
    x_ref,       # (B, Cin, HW)      B samples, channel-major, lane-dense
    w1sc_ref,    # (2*Cout, 9*Cpad)  rows[:Cout]=conv1 taps (BN1 scale folded),
                 #                   rows[Cout:]=1x1 shortcut at centre tap (BNsc folded)
    w2_ref,      # (Cout, 9*Cpad)    conv2 taps (BN2 scale folded)
    fc1w_ref,    # (Cout, Cout)      shrinkage FC1, (in, out), BN1d scale folded
    fc2w_ref,    # (Cout, Cout)      shrinkage FC2, (out, in)
    fc1b_ref,    # (1, Cout)         FC1 bias row (BN1d shift folded)
    vecs_ref,    # (Cout, 4)         [BN1 shift, BN2 shift, BNsc shift, FC2 bias]
    o_ref,       # (B, Cout, HW)
    pad_ref,     # VMEM (Cpad, HW + 2*(W+1)) merged row-padded flat image scratch
    slab_ref,    # VMEM (9*Cpad, B*HW)       K-packed tap slab (shared by both convs)
    *, H, W, cin, cout, cpad,
):
    HW = H * W
    Lp = W + 1                         # zero border (one padded row + 1) on each side
    B = x_ref.shape[0]
    cdt = slab_ref.dtype               # MXU operand dtype (f32 or bf16)

    # --- once per step: zero pad borders; zero slab (K-pad rows / stale-VMEM safety) ---
    pad_ref[:, :Lp] = jnp.zeros((pad_ref.shape[0], Lp), cdt)
    pad_ref[:, Lp + HW:] = jnp.zeros((pad_ref.shape[0], Lp), cdt)
    if cin < cpad or cout < cpad:
        slab_ref[...] = jnp.zeros_like(slab_ref)

    # dx = +-1 column-validity masks, materialised ONCE at full channel width
    # (row validity for dy = +-1 is handled by the zero border rows of pad_ref).
    col = lax.broadcasted_iota(jnp.int32, (cpad, HW), 1) % W
    mask_l = col >= 1                  # tap reads in[., w-1]
    mask_r = col < (W - 1)             # tap reads in[., w+1]
    zero = jnp.zeros((), cdt)

    def build_slab(get_sample, c):
        """Write the 9 shifted/masked taps of each sample into the K-packed slab."""
        for b in range(B):
            # interior write; borders stay zero (zeroed once per step above)
            pad_ref[:c, Lp:Lp + HW] = get_sample(b)           # (c, HW)
            lo = b * HW
            t = 0
            for dy in (-1, 0, 1):
                base = Lp + dy * W
                for dx in (-1, 0, 1):
                    s = pad_ref[:c, base + dx: base + dx + HW]   # lane-offset slice
                    if dx == -1:
                        s = jnp.where(mask_l[:c], s, zero)
                    elif dx == 1:
                        s = jnp.where(mask_r[:c], s, zero)
                    slab_ref[t * cpad: t * cpad + c, lo: lo + HW] = s
                    t += 1

    vecs = vecs_ref[...]                                         # (Cout, 4) f32
    shift1 = vecs[:, 0:1]
    shift2 = vecs[:, 1:2]
    shift_sc = vecs[:, 2:3]
    fc2b = vecs[:, 3:4]

    # --- conv1 + shortcut: one MXU matmul --------------------------------------
    build_slab(lambda b: x_ref[b], cin)
    big = jnp.dot(w1sc_ref[...], slab_ref[...],
                  preferred_element_type=jnp.float32)            # (2*Cout, B*HW) f32
    y1 = _leaky(big[:cout] + shift1)                             # conv1 -> BN1 -> LeakyReLU
    sc = big[cout:] + shift_sc                                   # 1x1 shortcut -> BN

    # --- conv2: one MXU matmul --------------------------------------------------
    build_slab(lambda b: y1[:, b * HW:(b + 1) * HW].astype(cdt), cout)
    r = jnp.dot(w2_ref[...], slab_ref[...],
                preferred_element_type=jnp.float32) + shift2     # (Cout, B*HW) f32

    # --- per-sample shrinkage + shortcut add + LeakyReLU ------------------------
    fc1w = fc1w_ref[...]
    fc2w = fc2w_ref[...]
    fc1b = fc1b_ref[...]
    for b in range(B):
        lo = b * HW
        rb = r[:, lo:lo + HW]
        avg = jnp.mean(jnp.abs(rb), axis=1, keepdims=True)       # GAP, (Cout, 1)
        # FC1 ((in,out)): z[o] = sum_i W[i,o]*avg[i]  -> (1, Cout)
        z = jnp.sum(fc1w * avg, axis=0, keepdims=True) + fc1b
        z = _leaky(z)
        # FC2 ((out,in)): z[o] = sum_i W[o,i]*z[i]    -> (Cout, 1)
        z = jnp.sum(fc2w * z, axis=1, keepdims=True) + fc2b
        thr = avg * (1.0 / (1.0 + jnp.exp(-z)))                  # (Cout, 1), thr >= 0
        res = rb - jnp.clip(rb, -thr, thr)                       # soft threshold
        o_ref[b] = _leaky(res + sc[:, lo:lo + HW]).astype(o_ref.dtype)


# ------------------------------ parameter packing ------------------------------
def _pack_conv_taps(w_hwio, scale, cpad):
    """(3,3,I,O) HWIO conv weight * per-O scale -> (O, 9*cpad) K-packed, zero-padded."""
    kh, kw, i_ch, o_ch = w_hwio.shape
    w = (w_hwio * scale).transpose(3, 0, 1, 2).reshape(o_ch, kh * kw, i_ch)
    if i_ch < cpad:
        w = jnp.pad(w, ((0, 0), (0, 0), (0, cpad - i_ch)))
    return w.reshape(o_ch, kh * kw * cpad)


def _prepare_kernel_params(p, cin, cout, cpad, compute_dtype):
    """Fold BN scales into weights, pack conv taps along K, stack shortcut onto conv1."""
    w1p = _pack_conv_taps(p["w1"], p["s1"], cpad)                # (Cout, 9*Cpad)
    w2p = _pack_conv_taps(p["w2"], p["s2"], cpad)                # (Cout, 9*Cpad)
    # 1x1 shortcut occupies the centre-tap (t=4) K block, zero elsewhere
    wscp = jnp.zeros((cout, 9 * cpad), jnp.float32)
    wscp = wscp.at[:, 4 * cpad:4 * cpad + cin].set(jnp.transpose(p["wsc"] * p["ssc"]))
    w1sc = jnp.concatenate([w1p, wscp], axis=0)                  # (2*Cout, 9*Cpad)

    fc1w = p["fc1w"] * p["bnf_s"]                                # (in, out), BN1d scale folded
    fc1b = (p["fc1b"] * p["bnf_s"] + p["bnf_b"])[None, :]        # (1, Cout)
    fc2w = jnp.transpose(p["fc2w"])                              # (out, in)
    vecs = jnp.stack([p["b1"], p["b2"], p["bsc"], p["fc2b"]], axis=1)  # (Cout, 4)
    return dict(
        w1sc=w1sc.astype(compute_dtype),
        w2p=w2p.astype(compute_dtype),
        fc1w=fc1w.astype(jnp.float32),
        fc2w=fc2w.astype(jnp.float32),
        fc1b=fc1b.astype(jnp.float32),
        vecs=vecs.astype(jnp.float32),
    )


def _choose_samples_per_step(n, hw, max_lanes=4096):
    """Largest divisor of n keeping B*HW lanes modest; for n >= 4 keep grid >= 2
    so v7x's two TensorCores both get work."""
    best = 1
    for b in range(1, n + 1):
        if n % b:
            continue
        if b * hw > max_lanes:
            continue
        if n >= 4 and n // b < 2:
            continue
        best = b
    return best


def basic_block_pallas(x_nchw, params, *, compute_dtype=jnp.float32,
                       out_dtype=jnp.float32, samples_per_step=None):
    """x_nchw: (N, Cin, H, W). Returns (N, Cout, H, W) in out_dtype."""
    N, Cin, H, W = x_nchw.shape
    Cout = params["w1"].shape[-1]
    HW = H * W
    Lp = W + 1
    Lpad = HW + 2 * Lp
    Cpad = ((max(Cin, Cout) + 7) // 8) * 8        # per-tap K block, sublane aligned

    B = samples_per_step if samples_per_step is not None else _choose_samples_per_step(N, HW)
    assert N % B == 0, "samples_per_step must divide batch size"
    G = N // B

    # channel-major flattened layout: a free reshape, no HBM transpose / pad
    x_flat = x_nchw.reshape(N, Cin, HW).astype(compute_dtype)
    kp = _prepare_kernel_params(params, Cin, Cout, Cpad, compute_dtype)

    kernel = functools.partial(_basic_block_kernel, H=H, W=W,
                               cin=Cin, cout=Cout, cpad=Cpad)

    # Explicit VMEM budget (sized against v7x's 32 MiB scoped default / 64 MiB physical).
    it = jnp.dtype(compute_dtype).itemsize
    ot = jnp.dtype(out_dtype).itemsize
    est = (2 * B * Cin * HW * it                      # x block, double-buffered
           + 2 * B * Cout * HW * ot                   # out block, double-buffered
           + 2 * 3 * Cout * 9 * Cpad * it             # packed conv / shortcut weights
           + 2 * (2 * Cout * Cout + 5 * Cout) * 4     # fc weights, bias, vecs
           + Cpad * Lpad * it                         # merged pad scratch
           + 9 * Cpad * B * HW * it)                  # K-packed slab scratch
    vmem_limit = int(min(max(4 * est, 4 << 20), 32 << 20))

    out = pl.pallas_call(
        kernel,
        out_shape=jax.ShapeDtypeStruct((N, Cout, HW), out_dtype),
        grid=(G,),
        in_specs=[
            pl.BlockSpec((B, Cin, HW), lambda n: (n, 0, 0)),         # x
            pl.BlockSpec((2 * Cout, 9 * Cpad), lambda n: (0, 0)),    # conv1 + shortcut (K-packed)
            pl.BlockSpec((Cout, 9 * Cpad), lambda n: (0, 0)),        # conv2 (K-packed)
            pl.BlockSpec((Cout, Cout), lambda n: (0, 0)),            # fc1
            pl.BlockSpec((Cout, Cout), lambda n: (0, 0)),            # fc2
            pl.BlockSpec((1, Cout), lambda n: (0, 0)),               # fc1 bias row
            pl.BlockSpec((Cout, 4), lambda n: (0, 0)),               # packed shifts / fc2 bias
        ],
        out_specs=pl.BlockSpec((B, Cout, HW), lambda n: (n, 0, 0)),
        scratch_shapes=[
            pltpu.VMEM((Cpad, Lpad), compute_dtype),                 # merged pad scratch
            pltpu.VMEM((9 * Cpad, B * HW), compute_dtype),           # K-packed tap slab
        ],
        compiler_params=pltpu.CompilerParams(
            dimension_semantics=("parallel",),
            vmem_limit_bytes=vmem_limit),
    )(x_flat, kp["w1sc"], kp["w2p"], kp["fc1w"], kp["fc2w"], kp["fc1b"], kp["vecs"])

    return out.reshape(N, Cout, H, W)


# ----------------------- pure-JAX reference (for checking) -----------------------
def basic_block_reference(x_nchw, p):
    x = jnp.transpose(x_nchw, (0, 2, 3, 1))  # NHWC

    def conv3x3(x, w):
        return lax.conv_general_dilated(
            x, w, (1, 1), "SAME", dimension_numbers=("NHWC", "HWIO", "NHWC"))

    y = _leaky(conv3x3(x, p["w1"]) * p["s1"] + p["b1"])
    r = conv3x3(y, p["w2"]) * p["s2"] + p["b2"]

    # Shrinkage
    x_abs = jnp.abs(r)
    avg = jnp.mean(x_abs, axis=(1, 2))                  # (N, Cout)
    z = avg @ p["fc1w"] + p["fc1b"]
    z = _leaky(z * p["bnf_s"] + p["bnf_b"])
    z = z @ p["fc2w"] + p["fc2b"]
    z = jax.nn.sigmoid(z)
    thr = (avg * z)[:, None, None, :]
    res = jnp.sign(r) * jnp.maximum(x_abs - thr, 0.0)

    # shortcut
    sc = jnp.einsum("nhwc,cd->nhwd", x, p["wsc"]) * p["ssc"] + p["bsc"]

    return jnp.transpose(_leaky(res + sc), (0, 3, 1, 2))


def _fold_bn(gamma, beta, mean, var, eps=1e-5):
    scale = gamma / jnp.sqrt(var + eps)
    shift = beta - mean * scale
    return scale, shift


def make_params(key, cin, cout):
    ks = jax.random.split(key, 16)
    u = lambda k, s: jax.random.uniform(k, s, jnp.float32, 0.5, 1.5)
    n = lambda k, s, sc=0.1: sc * jax.random.normal(k, s, jnp.float32)

    s1, b1 = _fold_bn(u(ks[0], (cout,)), n(ks[1], (cout,)), n(ks[2], (cout,)), u(ks[3], (cout,)))
    s2, b2 = _fold_bn(u(ks[4], (cout,)), n(ks[5], (cout,)), n(ks[6], (cout,)), u(ks[7], (cout,)))
    ssc, bsc = _fold_bn(u(ks[8], (cout,)), n(ks[9], (cout,)), n(ks[10], (cout,)), u(ks[11], (cout,)))
    bnf_s, bnf_b = _fold_bn(u(ks[12], (cout,)), n(ks[13], (cout,)), n(ks[14], (cout,)), u(ks[15], (cout,)))

    wk = jax.random.split(jax.random.fold_in(key, 123), 7)
    return dict(
        w1=n(wk[0], (3, 3, cin, cout), 0.2),
        s1=s1, b1=b1,
        w2=n(wk[1], (3, 3, cout, cout), 0.2),
        s2=s2, b2=b2,
        wsc=n(wk[2], (cin, cout), 0.2),
        ssc=ssc, bsc=bsc,
        fc1w=n(wk[3], (cout, cout), 0.3),   # (in, out)
        fc1b=n(wk[4], (cout,), 0.1),
        bnf_s=bnf_s, bnf_b=bnf_b,
        fc2w=n(wk[5], (cout, cout), 0.3),   # (in, out)
        fc2b=n(wk[6], (cout,), 0.1),
    )


if __name__ == "__main__":
    key = jax.random.PRNGKey(0)
    N, Cin, Cout, H, W = 2, 4, 8, 16, 16   # stride=1; Cin != Cout -> conv shortcut

    kx, kp = jax.random.split(key)
    x = jax.random.normal(kx, (N, Cin, H, W), jnp.float32)
    params = make_params(kp, Cin, Cout)

    ref = jax.block_until_ready(basic_block_reference(x, params))

    # f32 path (strict check)
    out = jax.block_until_ready(basic_block_pallas(x, params))
    assert out.shape == (N, Cout, H, W)
    assert jnp.allclose(out, ref, rtol=1e-4, atol=1e-4), "f32 mismatch vs reference"

    # bf16 MXU-operand + bf16 output path (valid on v5e/v6e/v7x); accumulation
    # and the elementwise epilogue stay f32.
    out_bf = jax.block_until_ready(
        basic_block_pallas(x, params, compute_dtype=jnp.bfloat16,
                           out_dtype=jnp.bfloat16))
    err = jnp.abs(out_bf.astype(jnp.float32) - ref)
    assert float(jnp.max(err)) < 0.5 and float(jnp.mean(err)) < 0.05, \
        "bf16 path deviates too much from reference"

    print("KERNEL_OK")
</pallas_src>

<mosaic_0001>
module attributes {stable_mosaic.version = 11 : i64} {
  func.func @_basic_block_kernel(%arg0: i32, %arg1: memref<2x4x256xf32, #tpu.memory_space<vmem>>, %arg2: memref<16x72xf32, #tpu.memory_space<vmem>>, %arg3: memref<8x72xf32, #tpu.memory_space<vmem>>, %arg4: memref<8x8xf32, #tpu.memory_space<vmem>>, %arg5: memref<8x8xf32, #tpu.memory_space<vmem>>, %arg6: memref<1x8xf32, #tpu.memory_space<vmem>>, %arg7: memref<8x4xf32, #tpu.memory_space<vmem>>, %arg8: memref<2x8x256xf32, #tpu.memory_space<vmem>>, %arg9: memref<8x290xf32, #tpu.memory_space<vmem>>, %arg10: memref<72x512xf32, #tpu.memory_space<vmem>>) attributes {dimension_semantics = [#tpu.dimension_semantics<parallel>], iteration_bounds = array<i64: 1>, scalar_prefetch = 0 : i64, scratch_operands = 2 : i64, tpu.core_type = #tpu.core_type<tc>, window_params = [{transform_indices = @transform_0, window_bounds = array<i64: 2, 4, 256>}, {pipeline_mode = #tpu.pipeline_mode<synchronous>, transform_indices = @transform_1, window_bounds = array<i64: 16, 72>}, {pipeline_mode = #tpu.pipeline_mode<synchronous>, transform_indices = @transform_2, window_bounds = array<i64: 8, 72>}, {pipeline_mode = #tpu.pipeline_mode<synchronous>, transform_indices = @transform_3, window_bounds = array<i64: 8, 8>}, {pipeline_mode = #tpu.pipeline_mode<synchronous>, transform_indices = @transform_4, window_bounds = array<i64: 8, 8>}, {pipeline_mode = #tpu.pipeline_mode<synchronous>, transform_indices = @transform_5, window_bounds = array<i64: 1, 8>}, {pipeline_mode = #tpu.pipeline_mode<synchronous>, transform_indices = @transform_6, window_bounds = array<i64: 8, 4>}, {transform_indices = @transform_7, window_bounds = array<i64: 2, 8, 256>}]} {
    %cst = arith.constant 0.000000e+00 : f32
    %0 = vector.broadcast %cst : f32 to vector<8x17xf32>
    %c0 = arith.constant 0 : index
    %c0_0 = arith.constant 0 : index
    %1 = vector.load %arg9[%c0, %c0_0] : memref<8x290xf32, #tpu.memory_space<vmem>>, vector<8x17xf32>
    tpu.vector_store %arg9[%c0, %c0_0], %0 {strides = array<i32>} : memref<8x290xf32, #tpu.memory_space<vmem>>, vector<8x17xf32>,
    %cst_1 = arith.constant 0.000000e+00 : f32
    %2 = vector.broadcast %cst_1 : f32 to vector<8x17xf32>
    %c0_2 = arith.constant 0 : index
    %c273 = arith.constant 273 : index
    %3 = vector.load %arg9[%c0_2, %c273] : memref<8x290xf32, #tpu.memory_space<vmem>>, vector<8x17xf32>
    tpu.vector_store %arg9[%c0_2, %c273], %2 {strides = array<i32>} : memref<8x290xf32, #tpu.memory_space<vmem>>, vector<8x17xf32>,
    %cst_3 = arith.constant 0.000000e+00 : f32
    %4 = vector.broadcast %cst_3 : f32 to vector<72x512xf32>
    %c0_4 = arith.constant 0 : index
    %c0_5 = arith.constant 0 : index
    %5 = vector.load %arg10[%c0_4, %c0_5] : memref<72x512xf32, #tpu.memory_space<vmem>>, vector<72x512xf32>
    tpu.vector_store %arg10[%c0_4, %c0_5], %4 {strides = array<i32>} : memref<72x512xf32, #tpu.memory_space<vmem>>, vector<72x512xf32>,
    %6 = tpu.iota {dimensions = array<i32: 1>} : vector<8x256xi32>
    %c16_i32 = arith.constant 16 : i32
    %c0_i32 = arith.constant 0 : i32
    %7 = arith.cmpi eq, %c16_i32, %c0_i32 : i32
    %c1_i32 = arith.constant 1 : i32
    %8 = arith.select %7, %c1_i32, %c16_i32 : i32
    %9 = vector.broadcast %8 : i32 to vector<8x256xi32>
    %10 = arith.remsi %6, %9 : vector<8x256xi32>
    %c0_i32_6 = arith.constant 0 : i32
    %11 = vector.broadcast %c0_i32_6 : i32 to vector<8x256xi32>
    %12 = arith.cmpi ne, %10, %11 : vector<8x256xi32>
    %c0_i32_7 = arith.constant 0 : i32
    %13 = vector.broadcast %c0_i32_7 : i32 to vector<8x256xi32>
    %14 = arith.cmpi slt, %10, %13 : vector<8x256xi32>
    %c0_i32_8 = arith.constant 0 : i32
    %15 = arith.cmpi slt, %8, %c0_i32_8 : i32
    %16 = vector.broadcast %15 : i1 to vector<8x256xi1>
    %17 = vector.broadcast %16 : vector<8x256xi1> to vector<8x256xi1>
    %18 = arith.xori %14, %17 : vector<8x256xi1>
    %19 = arith.andi %18, %12 : vector<8x256xi1>
    %20 = vector.broadcast %8 : i32 to vector<8x256xi32>
    %21 = arith.addi %10, %20 : vector<8x256xi32>
    %22 = arith.select %19, %21, %10 : vector<8x256xi1>, vector<8x256xi32>
    %c1_i32_9 = arith.constant 1 : i32
    %23 = vector.broadcast %c1_i32_9 : i32 to vector<8x256xi32>
    %24 = arith.cmpi sge, %22, %23 : vector<8x256xi32>
    %c15_i32 = arith.constant 15 : i32
    %25 = vector.broadcast %c15_i32 : i32 to vector<8x256xi32>
    %26 = arith.cmpi slt, %22, %25 : vector<8x256xi32>
    %c0_10 = arith.constant 0 : index
    %c0_11 = arith.constant 0 : index
    %27 = vector.load %arg7[%c0_10, %c0_11] : memref<8x4xf32, #tpu.memory_space<vmem>>, vector<8x4xf32>
    %28 = vector.extract_strided_slice %27 {offsets = [0, 0], sizes = [8, 1], strides = [1, 1]} : vector<8x4xf32> to vector<8x1xf32>
    %29 = vector.extract_strided_slice %27 {offsets = [0, 1], sizes = [8, 1], strides = [1, 1]} : vector<8x4xf32> to vector<8x1xf32>
    %30 = vector.extract_strided_slice %27 {offsets = [0, 2], sizes = [8, 1], strides = [1, 1]} : vector<8x4xf32> to vector<8x1xf32>
    %31 = vector.extract_strided_slice %27 {offsets = [0, 3], sizes = [8, 1], strides = [1, 1]} : vector<8x4xf32> to vector<8x1xf32>
    %c0_12 = arith.constant 0 : index
    %c0_13 = arith.constant 0 : index
    %c0_14 = arith.constant 0 : index
    %32 = vector.load %arg1[%c0_12, %c0_13, %c0_14] : memref<2x4x256xf32, #tpu.memory_space<vmem>>, vector<1x4x256xf32>
    %33 = vector.shape_cast %32 : vector<1x4x256xf32> to vector<4x256xf32>
    %c0_15 = arith.constant 0 : index
    %c17 = arith.constant 17 : index
    %34 = vector.load %arg9[%c0_15, %c17] : memref<8x290xf32, #tpu.memory_space<vmem>>, vector<4x256xf32>
    tpu.vector_store %arg9[%c0_15, %c17], %33 {strides = array<i32>} : memref<8x290xf32, #tpu.memory_space<vmem>>, vector<4x256xf32>,
    %c0_16 = arith.constant 0 : index
    %c0_17 = arith.constant 0 : index
    %35 = vector.load %arg9[%c0_16, %c0_17] : memref<8x290xf32, #tpu.memory_space<vmem>>, vector<4x256xf32>
    %36 = vector.extract_strided_slice %24 {offsets = [0, 0], sizes = [4, 256], strides = [1, 1]} : vector<8x256xi1> to vector<4x256xi1>
    %cst_18 = arith.constant 0.000000e+00 : f32
    %37 = vector.broadcast %cst_18 : f32 to vector<4x256xf32>
    %38 = arith.select %36, %35, %37 : vector<4x256xi1>, vector<4x256xf32>
    %c0_19 = arith.constant 0 : index
    %c0_20 = arith.constant 0 : index
    %39 = vector.load %arg10[%c0_19, %c0_20] : memref<72x512xf32, #tpu.memory_space<vmem>>, vector<4x256xf32>
    tpu.vector_store %arg10[%c0_19, %c0_20], %38 {strides = array<i32>} : memref<72x512xf32, #tpu.memory_space<vmem>>, vector<4x256xf32>,
    %c0_21 = arith.constant 0 : index
    %c1 = arith.constant 1 : index
    %40 = vector.load %arg9[%c0_21, %c1] : memref<8x290xf32, #tpu.memory_space<vmem>>, vector<4x256xf32>
    %c8 = arith.constant 8 : index
    %c0_22 = arith.constant 0 : index
    %41 = vector.load %arg10[%c8, %c0_22] : memref<72x512xf32, #tpu.memory_space<vmem>>, vector<4x256xf32>
    tpu.vector_store %arg10[%c8, %c0_22], %40 {strides = array<i32>} : memref<72x512xf32, #tpu.memory_space<vmem>>, vector<4x256xf32>,
    %c0_23 = arith.constant 0 : index
    %c2 = arith.constant 2 : index
    %42 = vector.load %arg9[%c0_23, %c2] : memref<8x290xf32, #tpu.memory_space<vmem>>, vector<4x256xf32>
    %43 = vector.extract_strided_slice %26 {offsets = [0, 0], sizes = [4, 256], strides = [1, 1]} : vector<8x256xi1> to vector<4x256xi1>
    %cst_24 = arith.constant 0.000000e+00 : f32
    %44 = vector.broadcast %cst_24 : f32 to vector<4x256xf32>
    %45 = arith.select %43, %42, %44 : vector<4x256xi1>, vector<4x256xf32>
    %c16 = arith.constant 16 : index
    %c0_25 = arith.constant 0 : index
    %46 = vector.load %arg10[%c16, %c0_25] : memref<72x512xf32, #tpu.memory_space<vmem>>, vector<4x256xf32>
    tpu.vector_store %arg10[%c16, %c0_25], %45 {strides = array<i32>} : memref<72x512xf32, #tpu.memory_space<vmem>>, vector<4x256xf32>,
    %c0_26 = arith.constant 0 : index
    %c16_27 = arith.constant 16 : index
    %47 = vector.load %arg9[%c0_26, %c16_27] : memref<8x290xf32, #tpu.memory_space<vmem>>, vector<4x256xf32>
    %48 = vector.extract_strided_slice %24 {offsets = [0, 0], sizes = [4, 256], strides = [1, 1]} : vector<8x256xi1> to vector<4x256xi1>
    %cst_28 = arith.constant 0.000000e+00 : f32
    %49 = vector.broadcast %cst_28 : f32 to vector<4x256xf32>
    %50 = arith.select %48, %47, %49 : vector<4x256xi1>, vector<4x256xf32>
    %c24 = arith.constant 24 : index
    %c0_29 = arith.constant 0 : index
    %51 = vector.load %arg10[%c24, %c0_29] : memref<72x512xf32, #tpu.memory_space<vmem>>, vector<4x256xf32>
    tpu.vector_store %arg10[%c24, %c0_29], %50 {strides = array<i32>} : memref<72x512xf32, #tpu.memory_space<vmem>>, vector<4x256xf32>,
    %c0_30 = arith.constant 0 : index
    %c17_31 = arith.constant 17 : index
    %52 = vector.load %arg9[%c0_30, %c17_31] : memref<8x290xf32, #tpu.memory_space<vmem>>, vector<4x256xf32>
    %c32 = arith.constant 32 : index
    %c0_32 = arith.constant 0 : index
    %53 = vector.load %arg10[%c32, %c0_32] : memref<72x512xf32, #tpu.memory_space<vmem>>, vector<4x256xf32>
    tpu.vector_store %arg10[%c32, %c0_32], %52 {strides = array<i32>} : memref<72x512xf32, #tpu.memory_space<vmem>>, vector<4x256xf32>,
    %c0_33 = arith.constant 0 : index
    %c18 = arith.constant 18 : index
    %54 = vector.load %arg9[%c0_33, %c18] : memref<8x290xf32, #tpu.memory_space<vmem>>, vector<4x256xf32>
    %55 = vector.extract_strided_slice %26 {offsets = [0, 0], sizes = [4, 256], strides = [1, 1]} : vector<8x256xi1> to vector<4x256xi1>
    %cst_34 = arith.constant 0.000000e+00 : f32
    %56 = vector.broadcast %cst_34 : f32 to vector<4x256xf32>
    %57 = arith.select %55, %54, %56 : vector<4x256xi1>, vector<4x256xf32>
    %c40 = arith.constant 40 : index
    %c0_35 = arith.constant 0 : index
    %58 = vector.load %arg10[%c40, %c0_35] : memref<72x512xf32, #tpu.memory_space<vmem>>, vector<4x256xf32>
    tpu.vector_store %arg10[%c40, %c0_35], %57 {strides = array<i32>} : memref<72x512xf32, #tpu.memory_space<vmem>>, vector<4x256xf32>,
    %c0_36 = arith.constant 0 : index
    %c32_37 = arith.constant 32 : index
    %59 = vector.load %arg9[%c0_36, %c32_37] : memref<8x290xf32, #tpu.memory_space<vmem>>, vector<4x256xf32>
    %60 = vector.extract_strided_slice %24 {offsets = [0, 0], sizes = [4, 256], strides = [1, 1]} : vector<8x256xi1> to vector<4x256xi1>
    %cst_38 = arith.constant 0.000000e+00 : f32
    %61 = vector.broadcast %cst_38 : f32 to vector<4x256xf32>
    %62 = arith.select %60, %59, %61 : vector<4x256xi1>, vector<4x256xf32>
    %c48 = arith.constant 48 : index
    %c0_39 = arith.constant 0 : index
    %63 = vector.load %arg10[%c48, %c0_39] : memref<72x512xf32, #tpu.memory_space<vmem>>, vector<4x256xf32>
    tpu.vector_store %arg10[%c48, %c0_39], %62 {strides = array<i32>} : memref<72x512xf32, #tpu.memory_space<vmem>>, vector<4x256xf32>,
    %c0_40 = arith.constant 0 : index
    %c33 = arith.constant 33 : index
    %64 = vector.load %arg9[%c0_40, %c33] : memref<8x290xf32, #tpu.memory_space<vmem>>, vector<4x256xf32>
    %c56 = arith.constant 56 : index
    %c0_41 = arith.constant 0 : index
    %65 = vector.load %arg10[%c56, %c0_41] : memref<72x512xf32, #tpu.memory_space<vmem>>, vector<4x256xf32>
    tpu.vector_store %arg10[%c56, %c0_41], %64 {strides = array<i32>} : memref<72x512xf32, #tpu.memory_space<vmem>>, vector<4x256xf32>,
    %c0_42 = arith.constant 0 : index
    %c34 = arith.constant 34 : index
    %66 = vector.load %arg9[%c0_42, %c34] : memref<8x290xf32, #tpu.memory_space<vmem>>, vector<4x256xf32>
    %67 = vector.extract_strided_slice %26 {offsets = [0, 0], sizes = [4, 256], strides = [1, 1]} : vector<8x256xi1> to vector<4x256xi1>
    %cst_43 = arith.constant 0.000000e+00 : f32
    %68 = vector.broadcast %cst_43 : f32 to vector<4x256xf32>
    %69 = arith.select %67, %66, %68 : vector<4x256xi1>, vector<4x256xf32>
    %c64 = arith.constant 64 : index
    %c0_44 = arith.constant 0 : index
    %70 = vector.load %arg10[%c64, %c0_44] : memref<72x512xf32, #tpu.memory_space<vmem>>, vector<4x256xf32>
    tpu.vector_store %arg10[%c64, %c0_44], %69 {strides = array<i32>} : memref<72x512xf32, #tpu.memory_space<vmem>>, vector<4x256xf32>,
    %c1_45 = arith.constant 1 : index
    %c0_46 = arith.constant 0 : index
    %c0_47 = arith.constant 0 : index
    %71 = vector.load %arg1[%c1_45, %c0_46, %c0_47] : memref<2x4x256xf32, #tpu.memory_space<vmem>>, vector<1x4x256xf32>
    %72 = vector.shape_cast %71 : vector<1x4x256xf32> to vector<4x256xf32>
    %c0_48 = arith.constant 0 : index
    %c17_49 = arith.constant 17 : index
    %73 = vector.load %arg9[%c0_48, %c17_49] : memref<8x290xf32, #tpu.memory_space<vmem>>, vector<4x256xf32>
    tpu.vector_store %arg9[%c0_48, %c17_49], %72 {strides = array<i32>} : memref<8x290xf32, #tpu.memory_space<vmem>>, vector<4x256xf32>,
    %c0_50 = arith.constant 0 : index
    %c0_51 = arith.constant 0 : index
    %74 = vector.load %arg9[%c0_50, %c0_51] : memref<8x290xf32, #tpu.memory_space<vmem>>, vector<4x256xf32>
    %75 = vector.extract_strided_slice %24 {offsets = [0, 0], sizes = [4, 256], strides = [1, 1]} : vector<8x256xi1> to vector<4x256xi1>
    %cst_52 = arith.constant 0.000000e+00 : f32
    %76 = vector.broadcast %cst_52 : f32 to vector<4x256xf32>
    %77 = arith.select %75, %74, %76 : vector<4x256xi1>, vector<4x256xf32>
    %c0_53 = arith.constant 0 : index
    %c256 = arith.constant 256 : index
    %78 = vector.load %arg10[%c0_53, %c256] : memref<72x512xf32, #tpu.memory_space<vmem>>, vector<4x256xf32>
    tpu.vector_store %arg10[%c0_53, %c256], %77 {strides = array<i32>} : memref<72x512xf32, #tpu.memory_space<vmem>>, vector<4x256xf32>,
    %c0_54 = arith.constant 0 : index
    %c1_55 = arith.constant 1 : index
    %79 = vector.load %arg9[%c0_54, %c1_55] : memref<8x290xf32, #tpu.memory_space<vmem>>, vector<4x256xf32>
    %c8_56 = arith.constant 8 : index
    %c256_57 = arith.constant 256 : index
    %80 = vector.load %arg10[%c8_56, %c256_57] : memref<72x512xf32, #tpu.memory_space<vmem>>, vector<4x256xf32>
    tpu.vector_store %arg10[%c8_56, %c256_57], %79 {strides = array<i32>} : memref<72x512xf32, #tpu.memory_space<vmem>>, vector<4x256xf32>,
    %c0_58 = arith.constant 0 : index
    %c2_59 = arith.constant 2 : index
    %81 = vector.load %arg9[%c0_58, %c2_59] : memref<8x290xf32, #tpu.memory_space<vmem>>, vector<4x256xf32>
    %82 = vector.extract_strided_slice %26 {offsets = [0, 0], sizes = [4, 256], strides = [1, 1]} : vector<8x256xi1> to vector<4x256xi1>
    %cst_60 = arith.constant 0.000000e+00 : f32
    %83 = vector.broadcast %cst_60 : f32 to vector<4x256xf32>
    %84 = arith.select %82, %81, %83 : vector<4x256xi1>, vector<4x256xf32>
    %c16_61 = arith.constant 16 : index
    %c256_62 = arith.constant 256 : index
    %85 = vector.load %arg10[%c16_61, %c256_62] : memref<72x512xf32, #tpu.memory_space<vmem>>, vector<4x256xf32>
    tpu.vector_store %arg10[%c16_61, %c256_62], %84 {strides = array<i32>} : memref<72x512xf32, #tpu.memory_space<vmem>>, vector<4x256xf32>,
    %c0_63 = arith.constant 0 : index
    %c16_64 = arith.constant 16 : index
    %86 = vector.load %arg9[%c0_63, %c16_64] : memref<8x290xf32, #tpu.memory_space<vmem>>, vector<4x256xf32>
    %87 = vector.extract_strided_slice %24 {offsets = [0, 0], sizes = [4, 256], strides = [1, 1]} : vector<8x256xi1> to vector<4x256xi1>
    %cst_65 = arith.constant 0.000000e+00 : f32
    %88 = vector.broadcast %cst_65 : f32 to vector<4x256xf32>
    %89 = arith.select %87, %86, %88 : vector<4x256xi1>, vector<4x256xf32>
    %c24_66 = arith.constant 24 : index
    %c256_67 = arith.constant 256 : index
    %90 = vector.load %arg10[%c24_66, %c256_67] : memref<72x512xf32, #tpu.memory_space<vmem>>, vector<4x256xf32>
    tpu.vector_store %arg10[%c24_66, %c256_67], %89 {strides = array<i32>} : memref<72x512xf32, #tpu.memory_space<vmem>>, vector<4x256xf32>,
    %c0_68 = arith.constant 0 : index
    %c17_69 = arith.constant 17 : index
    %91 = vector.load %arg9[%c0_68, %c17_69] : memref<8x290xf32, #tpu.memory_space<vmem>>, vector<4x256xf32>
    %c32_70 = arith.constant 32 : index
    %c256_71 = arith.constant 256 : index
    %92 = vector.load %arg10[%c32_70, %c256_71] : memref<72x512xf32, #tpu.memory_space<vmem>>, vector<4x256xf32>
    tpu.vector_store %arg10[%c32_70, %c256_71], %91 {strides = array<i32>} : memref<72x512xf32, #tpu.memory_space<vmem>>, vector<4x256xf32>,
    %c0_72 = arith.constant 0 : index
    %c18_73 = arith.constant 18 : index
    %93 = vector.load %arg9[%c0_72, %c18_73] : memref<8x290xf32, #tpu.memory_space<vmem>>, vector<4x256xf32>
    %94 = vector.extract_strided_slice %26 {offsets = [0, 0], sizes = [4, 256], strides = [1, 1]} : vector<8x256xi1> to vector<4x256xi1>
    %cst_74 = arith.constant 0.000000e+00 : f32
    %95 = vector.broadcast %cst_74 : f32 to vector<4x256xf32>
    %96 = arith.select %94, %93, %95 : vector<4x256xi1>, vector<4x256xf32>
    %c40_75 = arith.constant 40 : index
    %c256_76 = arith.constant 256 : index
    %97 = vector.load %arg10[%c40_75, %c256_76] : memref<72x512xf32, #tpu.memory_space<vmem>>, vector<4x256xf32>
    tpu.vector_store %arg10[%c40_75, %c256_76], %96 {strides = array<i32>} : memref<72x512xf32, #tpu.memory_space<vmem>>, vector<4x256xf32>,
    %c0_77 = arith.constant 0 : index
    %c32_78 = arith.constant 32 : index
    %98 = vector.load %arg9[%c0_77, %c32_78] : memref<8x290xf32, #tpu.memory_space<vmem>>, vector<4x256xf32>
    %99 = vector.extract_strided_slice %24 {offsets = [0, 0], sizes = [4, 256], strides = [1, 1]} : vector<8x256xi1> to vector<4x256xi1>
    %cst_79 = arith.constant 0.000000e+00 : f32
    %100 = vector.broadcast %cst_79 : f32 to vector<4x256xf32>
    %101 = arith.select %99, %98, %100 : vector<4x256xi1>, vector<4x256xf32>
    %c48_80 = arith.constant 48 : index
    %c256_81 = arith.constant 256 : index
    %102 = vector.load %arg10[%c48_80, %c256_81] : memref<72x512xf32, #tpu.memory_space<vmem>>, vector<4x256xf32>
    tpu.vector_store %arg10[%c48_80, %c256_81], %101 {strides = array<i32>} : memref<72x512xf32, #tpu.memory_space<vmem>>, vector<4x256xf32>,
    %c0_82 = arith.constant 0 : index
    %c33_83 = arith.constant 33 : index
    %103 = vector.load %arg9[%c0_82, %c33_83] : memref<8x290xf32, #tpu.memory_space<vmem>>, vector<4x256xf32>
    %c56_84 = arith.constant 56 : index
    %c256_85 = arith.constant 256 : index
    %104 = vector.load %arg10[%c56_84, %c256_85] : memref<72x512xf32, #tpu.memory_space<vmem>>, vector<4x256xf32>
    tpu.vector_store %arg10[%c56_84, %c256_85], %103 {strides = array<i32>} : memref<72x512xf32, #tpu.memory_space<vmem>>, vector<4x256xf32>,
    %c0_86 = arith.constant 0 : index
    %c34_87 = arith.constant 34 : index
    %105 = vector.load %arg9[%c0_86, %c34_87] : memref<8x290xf32, #tpu.memory_space<vmem>>, vector<4x256xf32>
    %106 = vector.extract_strided_slice %26 {offsets = [0, 0], sizes = [4, 256], strides = [1, 1]} : vector<8x256xi1> to vector<4x256xi1>
    %cst_88 = arith.constant 0.000000e+00 : f32
    %107 = vector.broadcast %cst_88 : f32 to vector<4x256xf32>
    %108 = arith.select %106, %105, %107 : vector<4x256xi1>, vector<4x256xf32>
    %c64_89 = arith.constant 64 : index
    %c256_90 = arith.constant 256 : index
    %109 = vector.load %arg10[%c64_89, %c256_90] : memref<72x512xf32, #tpu.memory_space<vmem>>, vector<4x256xf32>
    tpu.vector_store %arg10[%c64_89, %c256_90], %108 {strides = array<i32>} : memref<72x512xf32, #tpu.memory_space<vmem>>, vector<4x256xf32>,
    %c0_91 = arith.constant 0 : index
    %c0_92 = arith.constant 0 : index
    %110 = vector.load %arg2[%c0_91, %c0_92] : memref<16x72xf32, #tpu.memory_space<vmem>>, vector<16x72xf32>
    %c0_93 = arith.constant 0 : index
    %c0_94 = arith.constant 0 : index
    %111 = vector.load %arg10[%c0_93, %c0_94] : memref<72x512xf32, #tpu.memory_space<vmem>>, vector<72x512xf32>
    %cst_95 = arith.constant dense<0.000000e+00> : vector<16x512xf32>
    %112 = tpu.matmul %110, %111, %cst_95 {dimension_numbers = #tpu.dot_dimension_numbers<[1], [0], [0], [1], [0, 0, 1, 1], [], []>} : vector<16x72xf32>, vector<72x512xf32>, vector<16x512xf32> -> vector<16x512xf32>
    %113 = vector.extract_strided_slice %112 {offsets = [0, 0], sizes = [8, 512], strides = [1, 1]} : vector<16x512xf32> to vector<8x512xf32>
    %114 = vector.broadcast %28 : vector<8x1xf32> to vector<8x512xf32>
    %115 = arith.addf %113, %114 : vector<8x512xf32>
    %cst_96 = arith.constant 0.000000e+00 : f32
    %116 = vector.broadcast %cst_96 : f32 to vector<8x512xf32>
    %117 = arith.cmpf oge, %115, %116 : vector<8x512xf32>
    %cst_97 = arith.constant 2.000000e-01 : f32
    %118 = vector.broadcast %cst_97 : f32 to vector<8x512xf32>
    %119 = arith.mulf %118, %115 : vector<8x512xf32>
    %120 = arith.select %117, %115, %119 : vector<8x512xi1>, vector<8x512xf32>
    %121 = vector.extract_strided_slice %112 {offsets = [8, 0], sizes = [8, 512], strides = [1, 1]} : vector<16x512xf32> to vector<8x512xf32>
    %122 = vector.broadcast %30 : vector<8x1xf32> to vector<8x512xf32>
    %123 = arith.addf %121, %122 : vector<8x512xf32>
    %124 = vector.extract_strided_slice %120 {offsets = [0, 0], sizes = [8, 256], strides = [1, 1]} : vector<8x512xf32> to vector<8x256xf32>
    %c0_98 = arith.constant 0 : index
    %c17_99 = arith.constant 17 : index
    %125 = vector.load %arg9[%c0_98, %c17_99] : memref<8x290xf32, #tpu.memory_space<vmem>>, vector<8x256xf32>
    tpu.vector_store %arg9[%c0_98, %c17_99], %124 {strides = array<i32>} : memref<8x290xf32, #tpu.memory_space<vmem>>, vector<8x256xf32>,
    %c0_100 = arith.constant 0 : index
    %c0_101 = arith.constant 0 : index
    %126 = vector.load %arg9[%c0_100, %c0_101] : memref<8x290xf32, #tpu.memory_space<vmem>>, vector<8x256xf32>
    %cst_102 = arith.constant 0.000000e+00 : f32
    %127 = vector.broadcast %cst_102 : f32 to vector<8x256xf32>
    %128 = arith.select %24, %126, %127 : vector<8x256xi1>, vector<8x256xf32>
    %c0_103 = arith.constant 0 : index
    %c0_104 = arith.constant 0 : index
    %129 = vector.load %arg10[%c0_103, %c0_104] : memref<72x512xf32, #tpu.memory_space<vmem>>, vector<8x256xf32>
    tpu.vector_store %arg10[%c0_103, %c0_104], %128 {strides = array<i32>} : memref<72x512xf32, #tpu.memory_space<vmem>>, vector<8x256xf32>,
    %c0_105 = arith.constant 0 : index
    %c1_106 = arith.constant 1 : index
    %130 = vector.load %arg9[%c0_105, %c1_106] : memref<8x290xf32, #tpu.memory_space<vmem>>, vector<8x256xf32>
    %c8_107 = arith.constant 8 : index
    %c0_108 = arith.constant 0 : index
    %131 = vector.load %arg10[%c8_107, %c0_108] : memref<72x512xf32, #tpu.memory_space<vmem>>, vector<8x256xf32>
    tpu.vector_store %arg10[%c8_107, %c0_108], %130 {strides = array<i32>} : memref<72x512xf32, #tpu.memory_space<vmem>>, vector<8x256xf32>,
    %c0_109 = arith.constant 0 : index
    %c2_110 = arith.constant 2 : index
    %132 = vector.load %arg9[%c0_109, %c2_110] : memref<8x290xf32, #tpu.memory_space<vmem>>, vector<8x256xf32>
    %cst_111 = arith.constant 0.000000e+00 : f32
    %133 = vector.broadcast %cst_111 : f32 to vector<8x256xf32>
    %134 = arith.select %26, %132, %133 : vector<8x256xi1>, vector<8x256xf32>
    %c16_112 = arith.constant 16 : index
    %c0_113 = arith.constant 0 : index
    %135 = vector.load %arg10[%c16_112, %c0_113] : memref<72x512xf32, #tpu.memory_space<vmem>>, vector<8x256xf32>
    tpu.vector_store %arg10[%c16_112, %c0_113], %134 {strides = array<i32>} : memref<72x512xf32, #tpu.memory_space<vmem>>, vector<8x256xf32>,
    %c0_114 = arith.constant 0 : index
    %c16_115 = arith.constant 16 : index
    %136 = vector.load %arg9[%c0_114, %c16_115] : memref<8x290xf32, #tpu.memory_space<vmem>>, vector<8x256xf32>
    %cst_116 = arith.constant 0.000000e+00 : f32
    %137 = vector.broadcast %cst_116 : f32 to vector<8x256xf32>
    %138 = arith.select %24, %136, %137 : vector<8x256xi1>, vector<8x256xf32>
    %c24_117 = arith.constant 24 : index
    %c0_118 = arith.constant 0 : index
    %139 = vector.load %arg10[%c24_117, %c0_118] : memref<72x512xf32, #tpu.memory_space<vmem>>, vector<8x256xf32>
    tpu.vector_store %arg10[%c24_117, %c0_118], %138 {strides = array<i32>} : memref<72x512xf32, #tpu.memory_space<vmem>>, vector<8x256xf32>,
    %c0_119 = arith.constant 0 : index
    %c17_120 = arith.constant 17 : index
    %140 = vector.load %arg9[%c0_119, %c17_120] : memref<8x290xf32, #tpu.memory_space<vmem>>, vector<8x256xf32>
    %c32_121 = arith.constant 32 : index
    %c0_122 = arith.constant 0 : index
    %141 = vector.load %arg10[%c32_121, %c0_122] : memref<72x512xf32, #tpu.memory_space<vmem>>, vector<8x256xf32>
    tpu.vector_store %arg10[%c32_121, %c0_122], %140 {strides = array<i32>} : memref<72x512xf32, #tpu.memory_space<vmem>>, vector<8x256xf32>,
    %c0_123 = arith.constant 0 : index
    %c18_124 = arith.constant 18 : index
    %142 = vector.load %arg9[%c0_123, %c18_124] : memref<8x290xf32, #tpu.memory_space<vmem>>, vector<8x256xf32>
    %cst_125 = arith.constant 0.000000e+00 : f32
    %143 = vector.broadcast %cst_125 : f32 to vector<8x256xf32>
    %144 = arith.select %26, %142, %143 : vector<8x256xi1>, vector<8x256xf32>
    %c40_126 = arith.constant 40 : index
    %c0_127 = arith.constant 0 : index
    %145 = vector.load %arg10[%c40_126, %c0_127] : memref<72x512xf32, #tpu.memory_space<vmem>>, vector<8x256xf32>
    tpu.vector_store %arg10[%c40_126, %c0_127], %144 {strides = array<i32>} : memref<72x512xf32, #tpu.memory_space<vmem>>, vector<8x256xf32>,
    %c0_128 = arith.constant 0 : index
    %c32_129 = arith.constant 32 : index
    %146 = vector.load %arg9[%c0_128, %c32_129] : memref<8x290xf32, #tpu.memory_space<vmem>>, vector<8x256xf32>
    %cst_130 = arith.constant 0.000000e+00 : f32
    %147 = vector.broadcast %cst_130 : f32 to vector<8x256xf32>
    %148 = arith.select %24, %146, %147 : vector<8x256xi1>, vector<8x256xf32>
    %c48_131 = arith.constant 48 : index
    %c0_132 = arith.constant 0 : index
    %149 = vector.load %arg10[%c48_131, %c0_132] : memref<72x512xf32, #tpu.memory_space<vmem>>, vector<8x256xf32>
    tpu.vector_store %arg10[%c48_131, %c0_132], %148 {strides = array<i32>} : memref<72x512xf32, #tpu.memory_space<vmem>>, vector<8x256xf32>,
    %c0_133 = arith.constant 0 : index
    %c33_134 = arith.constant 33 : index
    %150 = vector.load %arg9[%c0_133, %c33_134] : memref<8x290xf32, #tpu.memory_space<vmem>>, vector<8x256xf32>
    %c56_135 = arith.constant 56 : index
    %c0_136 = arith.constant 0 : index
    %151 = vector.load %arg10[%c56_135, %c0_136] : memref<72x512xf32, #tpu.memory_space<vmem>>, vector<8x256xf32>
    tpu.vector_store %arg10[%c56_135, %c0_136], %150 {strides = array<i32>} : memref<72x512xf32, #tpu.memory_space<vmem>>, vector<8x256xf32>,
    %c0_137 = arith.constant 0 : index
    %c34_138 = arith.constant 34 : index
    %152 = vector.load %arg9[%c0_137, %c34_138] : memref<8x290xf32, #tpu.memory_space<vmem>>, vector<8x256xf32>
    %cst_139 = arith.constant 0.000000e+00 : f32
    %153 = vector.broadcast %cst_139 : f32 to vector<8x256xf32>
    %154 = arith.select %26, %152, %153 : vector<8x256xi1>, vector<8x256xf32>
    %c64_140 = arith.constant 64 : index
    %c0_141 = arith.constant 0 : index
    %155 = vector.load %arg10[%c64_140, %c0_141] : memref<72x512xf32, #tpu.memory_space<vmem>>, vector<8x256xf32>
    tpu.vector_store %arg10[%c64_140, %c0_141], %154 {strides = array<i32>} : memref<72x512xf32, #tpu.memory_space<vmem>>, vector<8x256xf32>,
    %156 = vector.extract_strided_slice %120 {offsets = [0, 256], sizes = [8, 256], strides = [1, 1]} : vector<8x512xf32> to vector<8x256xf32>
    %c0_142 = arith.constant 0 : index
    %c17_143 = arith.constant 17 : index
    %157 = vector.load %arg9[%c0_142, %c17_143] : memref<8x290xf32, #tpu.memory_space<vmem>>, vector<8x256xf32>
    tpu.vector_store %arg9[%c0_142, %c17_143], %156 {strides = array<i32>} : memref<8x290xf32, #tpu.memory_space<vmem>>, vector<8x256xf32>,
    %c0_144 = arith.constant 0 : index
    %c0_145 = arith.constant 0 : index
    %158 = vector.load %arg9[%c0_144, %c0_145] : memref<8x290xf32, #tpu.memory_space<vmem>>, vector<8x256xf32>
    %cst_146 = arith.constant 0.000000e+00 : f32
    %159 = vector.broadcast %cst_146 : f32 to vector<8x256xf32>
    %160 = arith.select %24, %158, %159 : vector<8x256xi1>, vector<8x256xf32>
    %c0_147 = arith.constant 0 : index
    %c256_148 = arith.constant 256 : index
    %161 = vector.load %arg10[%c0_147, %c256_148] : memref<72x512xf32, #tpu.memory_space<vmem>>, vector<8x256xf32>
    tpu.vector_store %arg10[%c0_147, %c256_148], %160 {strides = array<i32>} : memref<72x512xf32, #tpu.memory_space<vmem>>, vector<8x256xf32>,
    %c0_149 = arith.constant 0 : index
    %c1_150 = arith.constant 1 : index
    %162 = vector.load %arg9[%c0_149, %c1_150] : memref<8x290xf32, #tpu.memory_space<vmem>>, vector<8x256xf32>
    %c8_151 = arith.constant 8 : index
    %c256_152 = arith.constant 256 : index
    %163 = vector.load %arg10[%c8_151, %c256_152] : memref<72x512xf32, #tpu.memory_space<vmem>>, vector<8x256xf32>
    tpu.vector_store %arg10[%c8_151, %c256_152], %162 {strides = array<i32>} : memref<72x512xf32, #tpu.memory_space<vmem>>, vector<8x256xf32>,
    %c0_153 = arith.constant 0 : index
    %c2_154 = arith.constant 2 : index
    %164 = vector.load %arg9[%c0_153, %c2_154] : memref<8x290xf32, #tpu.memory_space<vmem>>, vector<8x256xf32>
    %cst_155 = arith.constant 0.000000e+00 : f32
    %165 = vector.broadcast %cst_155 : f32 to vector<8x256xf32>
    %166 = arith.select %26, %164, %165 : vector<8x256xi1>, vector<8x256xf32>
    %c16_156 = arith.constant 16 : index
    %c256_157 = arith.constant 256 : index
    %167 = vector.load %arg10[%c16_156, %c256_157] : memref<72x512xf32, #tpu.memory_space<vmem>>, vector<8x256xf32>
    tpu.vector_store %arg10[%c16_156, %c256_157], %166 {strides = array<i32>} : memref<72x512xf32, #tpu.memory_space<vmem>>, vector<8x256xf32>,
    %c0_158 = arith.constant 0 : index
    %c16_159 = arith.constant 16 : index
    %168 = vector.load %arg9[%c0_158, %c16_159] : memref<8x290xf32, #tpu.memory_space<vmem>>, vector<8x256xf32>
    %cst_160 = arith.constant 0.000000e+00 : f32
    %169 = vector.broadcast %cst_160 : f32 to vector<8x256xf32>
    %170 = arith.select %24, %168, %169 : vector<8x256xi1>, vector<8x256xf32>
    %c24_161 = arith.constant 24 : index
    %c256_162 = arith.constant 256 : index
    %171 = vector.load %arg10[%c24_161, %c256_162] : memref<72x512xf32, #tpu.memory_space<vmem>>, vector<8x256xf32>
    tpu.vector_store %arg10[%c24_161, %c256_162], %170 {strides = array<i32>} : memref<72x512xf32, #tpu.memory_space<vmem>>, vector<8x256xf32>,
    %c0_163 = arith.constant 0 : index
    %c17_164 = arith.constant 17 : index
    %172 = vector.load %arg9[%c0_163, %c17_164] : memref<8x290xf32, #tpu.memory_space<vmem>>, vector<8x256xf32>
    %c32_165 = arith.constant 32 : index
    %c256_166 = arith.constant 256 : index
    %173 = vector.load %arg10[%c32_165, %c256_166] : memref<72x512xf32, #tpu.memory_space<vmem>>, vector<8x256xf32>
    tpu.vector_store %arg10[%c32_165, %c256_166], %172 {strides = array<i32>} : memref<72x512xf32, #tpu.memory_space<vmem>>, vector<8x256xf32>,
    %c0_167 = arith.constant 0 : index
    %c18_168 = arith.constant 18 : index
    %174 = vector.load %arg9[%c0_167, %c18_168] : memref<8x290xf32, #tpu.memory_space<vmem>>, vector<8x256xf32>
    %cst_169 = arith.constant 0.000000e+00 : f32
    %175 = vector.broadcast %cst_169 : f32 to vector<8x256xf32>
    %176 = arith.select %26, %174, %175 : vector<8x256xi1>, vector<8x256xf32>
    %c40_170 = arith.constant 40 : index
    %c256_171 = arith.constant 256 : index
    %177 = vector.load %arg10[%c40_170, %c256_171] : memref<72x512xf32, #tpu.memory_space<vmem>>, vector<8x256xf32>
    tpu.vector_store %arg10[%c40_170, %c256_171], %176 {strides = array<i32>} : memref<72x512xf32, #tpu.memory_space<vmem>>, vector<8x256xf32>,
    %c0_172 = arith.constant 0 : index
    %c32_173 = arith.constant 32 : index
    %178 = vector.load %arg9[%c0_172, %c32_173] : memref<8x290xf32, #tpu.memory_space<vmem>>, vector<8x256xf32>
    %cst_174 = arith.constant 0.000000e+00 : f32
    %179 = vector.broadcast %cst_174 : f32 to vector<8x256xf32>
    %180 = arith.select %24, %178, %179 : vector<8x256xi1>, vector<8x256xf32>
    %c48_175 = arith.constant 48 : index
    %c256_176 = arith.constant 256 : index
    %181 = vector.load %arg10[%c48_175, %c256_176] : memref<72x512xf32, #tpu.memory_space<vmem>>, vector<8x256xf32>
    tpu.vector_store %arg10[%c48_175, %c256_176], %180 {strides = array<i32>} : memref<72x512xf32, #tpu.memory_space<vmem>>, vector<8x256xf32>,
    %c0_177 = arith.constant 0 : index
    %c33_178 = arith.constant 33 : index
    %182 = vector.load %arg9[%c0_177, %c33_178] : memref<8x290xf32, #tpu.memory_space<vmem>>, vector<8x256xf32>
    %c56_179 = arith.constant 56 : index
    %c256_180 = arith.constant 256 : index
    %183 = vector.load %arg10[%c56_179, %c256_180] : memref<72x512xf32, #tpu.memory_space<vmem>>, vector<8x256xf32>
    tpu.vector_store %arg10[%c56_179, %c256_180], %182 {strides = array<i32>} : memref<72x512xf32, #tpu.memory_space<vmem>>, vector<8x256xf32>,
    %c0_181 = arith.constant 0 : index
    %c34_182 = arith.constant 34 : index
    %184 = vector.load %arg9[%c0_181, %c34_182] : memref<8x290xf32, #tpu.memory_space<vmem>>, vector<8x256xf32>
    %cst_183 = arith.constant 0.000000e+00 : f32
    %185 = vector.broadcast %cst_183 : f32 to vector<8x256xf32>
    %186 = arith.select %26, %184, %185 : vector<8x256xi1>, vector<8x256xf32>
    %c64_184 = arith.constant 64 : index
    %c256_185 = arith.constant 256 : index
    %187 = vector.load %arg10[%c64_184, %c256_185] : memref<72x512xf32, #tpu.memory_space<vmem>>, vector<8x256xf32>
    tpu.vector_store %arg10[%c64_184, %c256_185], %186 {strides = array<i32>} : memref<72x512xf32, #tpu.memory_space<vmem>>, vector<8x256xf32>,
    %c0_186 = arith.constant 0 : index
    %c0_187 = arith.constant 0 : index
    %188 = vector.load %arg3[%c0_186, %c0_187] : memref<8x72xf32, #tpu.memory_space<vmem>>, vector<8x72xf32>
    %c0_188 = arith.constant 0 : index
    %c0_189 = arith.constant 0 : index
    %189 = vector.load %arg10[%c0_188, %c0_189] : memref<72x512xf32, #tpu.memory_space<vmem>>, vector<72x512xf32>
    %cst_190 = arith.constant dense<0.000000e+00> : vector<8x512xf32>
    %190 = tpu.matmul %188, %189, %cst_190 {dimension_numbers = #tpu.dot_dimension_numbers<[1], [0], [0], [1], [0, 0, 1, 1], [], []>} : vector<8x72xf32>, vector<72x512xf32>, vector<8x512xf32> -> vector<8x512xf32>
    %191 = vector.broadcast %29 : vector<8x1xf32> to vector<8x512xf32>
    %192 = arith.addf %190, %191 : vector<8x512xf32>
    %c0_191 = arith.constant 0 : index
    %c0_192 = arith.constant 0 : index
    %193 = vector.load %arg4[%c0_191, %c0_192] : memref<8x8xf32, #tpu.memory_space<vmem>>, vector<8x8xf32>
    %c0_193 = arith.constant 0 : index
    %c0_194 = arith.constant 0 : index
    %194 = vector.load %arg5[%c0_193, %c0_194] : memref<8x8xf32, #tpu.memory_space<vmem>>, vector<8x8xf32>
    %c0_195 = arith.constant 0 : index
    %c0_196 = arith.constant 0 : index
    %195 = vector.load %arg6[%c0_195, %c0_196] : memref<1x8xf32, #tpu.memory_space<vmem>>, vector<1x8xf32>
    %196 = vector.extract_strided_slice %192 {offsets = [0, 0], sizes = [8, 256], strides = [1, 1]} : vector<8x512xf32> to vector<8x256xf32>
    %197 = math.absf %196 : vector<8x256xf32>
    %cst_197 = arith.constant dense<0.000000e+00> : vector<8xf32>
    %198 = vector.multi_reduction <add>, %197, %cst_197 [1] : vector<8x256xf32> to vector<8xf32>
    %199 = vector.shape_cast %198 : vector<8xf32> to vector<8x1xf32>
    %cst_198 = arith.constant 2.560000e+02 : f32
    %200 = vector.broadcast %cst_198 : f32 to vector<8x1xf32>
    %201 = arith.divf %199, %200 : vector<8x1xf32>
    %202 = vector.broadcast %201 : vector<8x1xf32> to vector<8x8xf32>
    %203 = arith.mulf %193, %202 : vector<8x8xf32>
    %cst_199 = arith.constant dense<0.000000e+00> : vector<8xf32>
    %204 = vector.multi_reduction <add>, %203, %cst_199 [0] : vector<8x8xf32> to vector<8xf32>
    %205 = vector.shape_cast %204 : vector<8xf32> to vector<1x8xf32>
    %206 = arith.addf %205, %195 : vector<1x8xf32>
    %cst_200 = arith.constant 0.000000e+00 : f32
    %207 = vector.broadcast %cst_200 : f32 to vector<1x8xf32>
    %208 = arith.cmpf oge, %206, %207 : vector<1x8xf32>
    %cst_201 = arith.constant 2.000000e-01 : f32
    %209 = vector.broadcast %cst_201 : f32 to vector<1x8xf32>
    %210 = arith.mulf %209, %206 : vector<1x8xf32>
    %211 = arith.select %208, %206, %210 : vector<1x8xi1>, vector<1x8xf32>
    %212 = vector.broadcast %211 : vector<1x8xf32> to vector<8x8xf32>
    %213 = arith.mulf %194, %212 : vector<8x8xf32>
    %cst_202 = arith.constant dense<0.000000e+00> : vector<8xf32>
    %214 = vector.multi_reduction <add>, %213, %cst_202 [1] : vector<8x8xf32> to vector<8xf32>
    %215 = vector.shape_cast %214 : vector<8xf32> to vector<8x1xf32>
    %216 = arith.addf %215, %31 : vector<8x1xf32>
    %cst_203 = arith.constant 0.000000e+00 : f32
    %217 = vector.broadcast %cst_203 : f32 to vector<8x1xf32>
    %218 = arith.subf %217, %216 : vector<8x1xf32>
    %219 = math.exp %218 : vector<8x1xf32>
    %cst_204 = arith.constant 1.000000e+00 : f32
    %220 = vector.broadcast %cst_204 : f32 to vector<8x1xf32>
    %221 = arith.addf %220, %219 : vector<8x1xf32>
    %cst_205 = arith.constant 1.000000e+00 : f32
    %222 = vector.broadcast %cst_205 : f32 to vector<8x1xf32>
    %223 = arith.divf %222, %221 : vector<8x1xf32>
    %224 = arith.mulf %201, %223 : vector<8x1xf32>
    %cst_206 = arith.constant 0.000000e+00 : f32
    %225 = vector.broadcast %cst_206 : f32 to vector<8x1xf32>
    %226 = arith.subf %225, %224 : vector<8x1xf32>
    %227 = vector.broadcast %226 : vector<8x1xf32> to vector<8x256xf32>
    %228 = arith.maximumf %227, %196 : vector<8x256xf32>
    %229 = vector.broadcast %224 : vector<8x1xf32> to vector<8x256xf32>
    %230 = arith.minimumf %229, %228 : vector<8x256xf32>
    %231 = arith.subf %196, %230 : vector<8x256xf32>
    %232 = vector.extract_strided_slice %123 {offsets = [0, 0], sizes = [8, 256], strides = [1, 1]} : vector<8x512xf32> to vector<8x256xf32>
    %233 = arith.addf %231, %232 : vector<8x256xf32>
    %cst_207 = arith.constant 0.000000e+00 : f32
    %234 = vector.broadcast %cst_207 : f32 to vector<8x256xf32>
    %235 = arith.cmpf oge, %233, %234 : vector<8x256xf32>
    %cst_208 = arith.constant 2.000000e-01 : f32
    %236 = vector.broadcast %cst_208 : f32 to vector<8x256xf32>
    %237 = arith.mulf %236, %233 : vector<8x256xf32>
    %238 = arith.select %235, %233, %237 : vector<8x256xi1>, vector<8x256xf32>
    %c0_209 = arith.constant 0 : index
    %c0_210 = arith.constant 0 : index
    %c0_211 = arith.constant 0 : index
    %239 = vector.load %arg8[%c0_209, %c0_210, %c0_211] : memref<2x8x256xf32, #tpu.memory_space<vmem>>, vector<1x8x256xf32>
    %240 = vector.shape_cast %239 : vector<1x8x256xf32> to vector<8x256xf32>
    %241 = vector.shape_cast %238 : vector<8x256xf32> to vector<1x8x256xf32>
    tpu.vector_store %arg8[%c0_209, %c0_210, %c0_211], %241 {strides = array<i32>} : memref<2x8x256xf32, #tpu.memory_space<vmem>>, vector<1x8x256xf32>,
    %242 = vector.extract_strided_slice %192 {offsets = [0, 256], sizes = [8, 256], strides = [1, 1]} : vector<8x512xf32> to vector<8x256xf32>
    %243 = math.absf %242 : vector<8x256xf32>
    %cst_212 = arith.constant dense<0.000000e+00> : vector<8xf32>
    %244 = vector.multi_reduction <add>, %243, %cst_212 [1] : vector<8x256xf32> to vector<8xf32>
    %245 = vector.shape_cast %244 : vector<8xf32> to vector<8x1xf32>
    %cst_213 = arith.constant 2.560000e+02 : f32
    %246 = vector.broadcast %cst_213 : f32 to vector<8x1xf32>
    %247 = arith.divf %245, %246 : vector<8x1xf32>
    %248 = vector.broadcast %247 : vector<8x1xf32> to vector<8x8xf32>
    %249 = arith.mulf %193, %248 : vector<8x8xf32>
    %cst_214 = arith.constant dense<0.000000e+00> : vector<8xf32>
    %250 = vector.multi_reduction <add>, %249, %cst_214 [0] : vector<8x8xf32> to vector<8xf32>
    %251 = vector.shape_cast %250 : vector<8xf32> to vector<1x8xf32>
    %252 = arith.addf %251, %195 : vector<1x8xf32>
    %cst_215 = arith.constant 0.000000e+00 : f32
    %253 = vector.broadcast %cst_215 : f32 to vector<1x8xf32>
    %254 = arith.cmpf oge, %252, %253 : vector<1x8xf32>
    %cst_216 = arith.constant 2.000000e-01 : f32
    %255 = vector.broadcast %cst_216 : f32 to vector<1x8xf32>
    %256 = arith.mulf %255, %252 : vector<1x8xf32>
    %257 = arith.select %254, %252, %256 : vector<1x8xi1>, vector<1x8xf32>
    %258 = vector.broadcast %257 : vector<1x8xf32> to vector<8x8xf32>
    %259 = arith.mulf %194, %258 : vector<8x8xf32>
    %cst_217 = arith.constant dense<0.000000e+00> : vector<8xf32>
    %260 = vector.multi_reduction <add>, %259, %cst_217 [1] : vector<8x8xf32> to vector<8xf32>
    %261 = vector.shape_cast %260 : vector<8xf32> to vector<8x1xf32>
    %262 = arith.addf %261, %31 : vector<8x1xf32>
    %cst_218 = arith.constant 0.000000e+00 : f32
    %263 = vector.broadcast %cst_218 : f32 to vector<8x1xf32>
    %264 = arith.subf %263, %262 : vector<8x1xf32>
    %265 = math.exp %264 : vector<8x1xf32>
    %cst_219 = arith.constant 1.000000e+00 : f32
    %266 = vector.broadcast %cst_219 : f32 to vector<8x1xf32>
    %267 = arith.addf %266, %265 : vector<8x1xf32>
    %cst_220 = arith.constant 1.000000e+00 : f32
    %268 = vector.broadcast %cst_220 : f32 to vector<8x1xf32>
    %269 = arith.divf %268, %267 : vector<8x1xf32>
    %270 = arith.mulf %247, %269 : vector<8x1xf32>
    %cst_221 = arith.constant 0.000000e+00 : f32
    %271 = vector.broadcast %cst_221 : f32 to vector<8x1xf32>
    %272 = arith.subf %271, %270 : vector<8x1xf32>
    %273 = vector.broadcast %272 : vector<8x1xf32> to vector<8x256xf32>
    %274 = arith.maximumf %273, %242 : vector<8x256xf32>
    %275 = vector.broadcast %270 : vector<8x1xf32> to vector<8x256xf32>
    %276 = arith.minimumf %275, %274 : vector<8x256xf32>
    %277 = arith.subf %242, %276 : vector<8x256xf32>
    %278 = vector.extract_strided_slice %123 {offsets = [0, 256], sizes = [8, 256], strides = [1, 1]} : vector<8x512xf32> to vector<8x256xf32>
    %279 = arith.addf %277, %278 : vector<8x256xf32>
    %cst_222 = arith.constant 0.000000e+00 : f32
    %280 = vector.broadcast %cst_222 : f32 to vector<8x256xf32>
    %281 = arith.cmpf oge, %279, %280 : vector<8x256xf32>
    %cst_223 = arith.constant 2.000000e-01 : f32
    %282 = vector.broadcast %cst_223 : f32 to vector<8x256xf32>
    %283 = arith.mulf %282, %279 : vector<8x256xf32>
    %284 = arith.select %281, %279, %283 : vector<8x256xi1>, vector<8x256xf32>
    %c1_224 = arith.constant 1 : index
    %c0_225 = arith.constant 0 : index
    %c0_226 = arith.constant 0 : index
    %285 = vector.load %arg8[%c1_224, %c0_225, %c0_226] : memref<2x8x256xf32, #tpu.memory_space<vmem>>, vector<1x8x256xf32>
    %286 = vector.shape_cast %285 : vector<1x8x256xf32> to vector<8x256xf32>
    %287 = vector.shape_cast %284 : vector<8x256xf32> to vector<1x8x256xf32>
    tpu.vector_store %arg8[%c1_224, %c0_225, %c0_226], %287 {strides = array<i32>} : memref<2x8x256xf32, #tpu.memory_space<vmem>>, vector<1x8x256xf32>,
    return
  }
  func.func @transform_0(%arg0: i32) -> (i32, i32, i32) {
    %c0_i32 = arith.constant 0 : i32
    %c0_i32_0 = arith.constant 0 : i32
    %c0_i32_1 = arith.constant 0 : i32
    return %arg0, %c0_i32, %c0_i32_0 : i32, i32, i32
  }
  func.func @transform_1(%arg0: i32) -> (i32, i32) {
    %c0_i32 = arith.constant 0 : i32
    %c0_i32_0 = arith.constant 0 : i32
    %c0_i32_1 = arith.constant 0 : i32
    return %c0_i32, %c0_i32_0 : i32, i32
  }
  func.func @transform_2(%arg0: i32) -> (i32, i32) {
    %c0_i32 = arith.constant 0 : i32
    %c0_i32_0 = arith.constant 0 : i32
    %c0_i32_1 = arith.constant 0 : i32
    return %c0_i32, %c0_i32_0 : i32, i32
  }
  func.func @transform_3(%arg0: i32) -> (i32, i32) {
    %c0_i32 = arith.constant 0 : i32
    %c0_i32_0 = arith.constant 0 : i32
    %c0_i32_1 = arith.constant 0 : i32
    return %c0_i32, %c0_i32_0 : i32, i32
  }
  func.func @transform_4(%arg0: i32) -> (i32, i32) {
    %c0_i32 = arith.constant 0 : i32
    %c0_i32_0 = arith.constant 0 : i32
    %c0_i32_1 = arith.constant 0 : i32
    return %c0_i32, %c0_i32_0 : i32, i32
  }
  func.func @transform_5(%arg0: i32) -> (i32, i32) {
    %c0_i32 = arith.constant 0 : i32
    %c0_i32_0 = arith.constant 0 : i32
    %c0_i32_1 = arith.constant 0 : i32
    return %c0_i32, %c0_i32_0 : i32, i32
  }
  func.func @transform_6(%arg0: i32) -> (i32, i32) {
    %c0_i32 = arith.constant 0 : i32
    %c0_i32_0 = arith.constant 0 : i32
    %c0_i32_1 = arith.constant 0 : i32
    return %c0_i32, %c0_i32_0 : i32, i32
  }
  func.func @transform_7(%arg0: i32) -> (i32, i32, i32) {
    %c0_i32 = arith.constant 0 : i32
    %c0_i32_0 = arith.constant 0 : i32
    %c0_i32_1 = arith.constant 0 : i32
    return %arg0, %c0_i32, %c0_i32_0 : i32, i32, i32
  }
}

</mosaic_0001>

<llo_original>
// kernel: tpu_custom_call.1
$region0: #{tpu_custom_call.1}
  #allocation0 [shape = 'u32[]', space=smem, size = 0x4, offset = 0x4, fixed_abs, tag = 'smem constant byte address 0x4 - core index']
  #allocation1 [shape = 'u32[144,128]{1,0:T(1,128)}', space=vmem, size = 0x12000, scoped, tag = 'internal scratch']
  #allocation2 [shape = 'f32[8,290]{1,0:T(8,128)}', space=vmem, size = 0x3000, scoped, tag = 'scratch operand']
  #allocation3 [shape = 'f32[72,512]{1,0:T(8,128)}', space=vmem, size = 0x24000, scoped, tag = 'scratch operand']
  %s0 = inlined_call_operand.hbm [shape: f32[2,4,256], index: 0, kind: input, shape index: {}]
  %s1 = inlined_call_operand.hbm [shape: f32[16,72], index: 1, kind: input, shape index: {}]
  %s2 = inlined_call_operand.vmem [shape: f32[8,72], index: 2, kind: input, shape index: {}]
  %s3 = inlined_call_operand.vmem [shape: f32[8,8], index: 3, kind: input, shape index: {}]
  %s4 = inlined_call_operand.vmem [shape: f32[8,8], index: 4, kind: input, shape index: {}]
  %s5 = inlined_call_operand.vmem [shape: f32[1,8], index: 5, kind: input, shape index: {}]
  %s6 = inlined_call_operand.vmem [shape: f32[8,4], index: 6, kind: input, shape index: {}]
  %s7 = inlined_call_operand.hbm [shape: f32[2,8,256], index: 7, kind: output, shape index: {}]
  %s8 = sld [smem:[#allocation0]]
  $region46: #{tpu_custom_call.1} parent=0
    _
  %s10 = ssub.s32 1, %s8
  %s11 = scalar_select 0, %s10, %s8
  $region1: #{tpu_custom_call.1} parent=0
    #allocation4 [shape = 'u8[8192]{0}', space=vmem, size = 0x2000, scoped, tag = 'input window, operand 0, single buffered']
    #allocation5 [shape = 's32[1]{0}', space=sflag, size = 0x4, scoped, tag = 'scoped memory for tpu_custom_call.1']
    #allocation6 [shape = 's32[1]{0}', space=sflag, size = 0x4, scoped, tag = 'scoped memory for tpu_custom_call.1']
    #allocation7 [shape = 'u8[8192]{0}', space=vmem, size = 0x2000, scoped, tag = 'input window, operand 1, single buffered']
    #allocation8 [shape = 's32[1]{0}', space=sflag, size = 0x4, scoped, tag = 'scoped memory for tpu_custom_call.1']
    #allocation9 [shape = 'u8[16384]{0}', space=vmem, size = 0x4000, scoped, tag = 'output window, operand 0, single buffered']
    %12 = vsyncpa [#allocation5], 0
    %13 = vsyncpa [#allocation8], 0
    %14 = vsyncpa [#allocation6], 0
    // Predicated region
    $region2: #{tpu_custom_call.1} parent=1 // pred_check
      _
    $region3: #{tpu_custom_call.1} parent=1 // pred_check_branch
      %16 = sbr.rel (0) target = $region5
    $region4: #{tpu_custom_call.1} parent=1 // pred_region
      %s18 = ssub.s32 256, 256
      %19 = vsyncadd [#allocation5], %s18
      %s20 = sshll.u32 [#allocation4], 4
      %s21 = int_to_ptr.vmem [resolvable:$true] %s20
      %26 = dma.hbm_to_vmem [thread:$0]  %s0, 256, %s21, [#allocation5], 128, 128, 8
    $region5: #{tpu_custom_call.1} parent=1 // pred_fallthru
      _
    // Predicated region
    $region6: #{tpu_custom_call.1} parent=1 // pred_check
      _
    $region7: #{tpu_custom_call.1} parent=1 // pred_check_branch
      %28 = sbr.rel (0) target = $region9
    $region8: #{tpu_custom_call.1} parent=1 // pred_region
      %s30 = ssub.s32 256, 256
      %31 = vsyncadd [#allocation8], %s30
      %s32 = sshll.u32 [#allocation7], 4
      %s33 = int_to_ptr.vmem [resolvable:$true] %s32
      %38 = dma.hbm_to_vmem [thread:$0]  %s1, 256, %s33, [#allocation8], 128, 128, 8
    $region9: #{tpu_custom_call.1} parent=1 // pred_fallthru
      _
    // Predicated region
    $region10: #{tpu_custom_call.1} parent=1 // pred_check
      _
    $region11: #{tpu_custom_call.1} parent=1 // pred_check_branch
      %40 = sbr.rel (0) target = $region13
    $region12: #{tpu_custom_call.1} parent=1 // pred_region
      _
    $region13: #{tpu_custom_call.1} parent=1 // pred_fallthru
      _
    // Predicated region
    $region14: #{tpu_custom_call.1} parent=1 // pred_check
      _
    $region15: #{tpu_custom_call.1} parent=1 // pred_check_branch
      %42 = sbr.rel (0) target = $region17
    $region16: #{tpu_custom_call.1} parent=1 // pred_region
      _
    $region17: #{tpu_custom_call.1} parent=1 // pred_fallthru
      _
    // Predicated region
    $region18: #{tpu_custom_call.1} parent=1 // pred_check
      _
    $region19: #{tpu_custom_call.1} parent=1 // pred_check_branch
      %44 = sbr.rel (0) target = $region21
    $region20: #{tpu_custom_call.1} parent=1 // pred_region
      _
    $region21: #{tpu_custom_call.1} parent=1 // pred_fallthru
      _
    // Predicated region
    $region22: #{tpu_custom_call.1} parent=1 // pred_check
      _
    $region23: #{tpu_custom_call.1} parent=1 // pred_check_branch
      %46 = sbr.rel (0) target = $region25
    $region24: #{tpu_custom_call.1} parent=1 // pred_region
      _
    $region25: #{tpu_custom_call.1} parent=1 // pred_fallthru
      _
    // Predicated region
    $region26: #{tpu_custom_call.1} parent=1 // pred_check
      _
    $region27: #{tpu_custom_call.1} parent=1 // pred_check_branch
      %48 = sbr.rel (0) target = $region29
    $region28: #{tpu_custom_call.1} parent=1 // pred_region
      _
    $region29: #{tpu_custom_call.1} parent=1 // pred_fallthru
      _
    // Predicated region
    $region30: #{tpu_custom_call.1} parent=1 // pred_check
      _
    $region31: #{tpu_custom_call.1} parent=1 // pred_check_branch
      %50 = sbr.rel (0) target = $region33
    $region32: #{tpu_custom_call.1} parent=1 // pred_region
      %51 = dma.done [#allocation5], 256
    $region33: #{tpu_custom_call.1} parent=1 // pred_fallthru
      _
    // Predicated region
    $region34: #{tpu_custom_call.1} parent=1 // pred_check
      _
    $region35: #{tpu_custom_call.1} parent=1 // pred_check_branch
      %53 = sbr.rel (0) target = $region37
    $region36: #{tpu_custom_call.1} parent=1 // pred_region
      %54 = dma.done [#allocation8], 256
    $region37: #{tpu_custom_call.1} parent=1 // pred_fallthru
      _
    %vm55 = vcmask 138240
    %56 = vst.msk [vmem:[#allocation2] sm:$0xff] %vm55, 0.0
    %vm57 = vcmask 277640
    %58 = vst.msk [vmem:[#allocation2 + $0x10] sm:$0xff] %vm57, 0.0
    %59 = vst [vmem:[#allocation3] sm:$0xff] 0.0
    %60 = vst [vmem:[#allocation3 + $0x8] sm:$0xff] 0.0
    %61 = vst [vmem:[#allocation3 + $0x10] sm:$0xff] 0.0
    %62 = vst [vmem:[#allocation3 + $0x18] sm:$0xff] 0.0
    %63 = vst [vmem:[#allocation3 + $0x20] sm:$0xff] 0.0
    %64 = vst [vmem:[#allocation3 + $0x28] sm:$0xff] 0.0
    %65 = vst [vmem:[#allocation3 + $0x30] sm:$0xff] 0.0
    %66 = vst [vmem:[#allocation3 + $0x38] sm:$0xff] 0.0
    %67 = vst [vmem:[#allocation3 + $0x40] sm:$0xff] 0.0
    %68 = vst [vmem:[#allocation3 + $0x48] sm:$0xff] 0.0
    %69 = vst [vmem:[#allocation3 + $0x50] sm:$0xff] 0.0
    %70 = vst [vmem:[#allocation3 + $0x58] sm:$0xff] 0.0
    %71 = vst [vmem:[#allocation3 + $0x60] sm:$0xff] 0.0
    %72 = vst [vmem:[#allocation3 + $0x68] sm:$0xff] 0.0
    %73 = vst [vmem:[#allocation3 + $0x70] sm:$0xff] 0.0
    %74 = vst [vmem:[#allocation3 + $0x78] sm:$0xff] 0.0
    %75 = vst [vmem:[#allocation3 + $0x80] sm:$0xff] 0.0
    %76 = vst [vmem:[#allocation3 + $0x88] sm:$0xff] 0.0
    %77 = vst [vmem:[#allocation3 + $0x90] sm:$0xff] 0.0
    %78 = vst [vmem:[#allocation3 + $0x98] sm:$0xff] 0.0
    %79 = vst [vmem:[#allocation3 + $0xa0] sm:$0xff] 0.0
    %80 = vst [vmem:[#allocation3 + $0xa8] sm:$0xff] 0.0
    %81 = vst [vmem:[#allocation3 + $0xb0] sm:$0xff] 0.0
    %82 = vst [vmem:[#allocation3 + $0xb8] sm:$0xff] 0.0
    %83 = vst [vmem:[#allocation3 + $0xc0] sm:$0xff] 0.0
    %84 = vst [vmem:[#allocation3 + $0xc8] sm:$0xff] 0.0
    %85 = vst [vmem:[#allocation3 + $0xd0] sm:$0xff] 0.0
    %86 = vst [vmem:[#allocation3 + $0xd8] sm:$0xff] 0.0
    %87 = vst [vmem:[#allocation3 + $0xe0] sm:$0xff] 0.0
    %88 = vst [vmem:[#allocation3 + $0xe8] sm:$0xff] 0.0
    %89 = vst [vmem:[#allocation3 + $0xf0] sm:$0xff] 0.0
    %90 = vst [vmem:[#allocation3 + $0xf8] sm:$0xff] 0.0
    %91 = vst [vmem:[#allocation3 + $0x100] sm:$0xff] 0.0
    %92 = vst [vmem:[#allocation3 + $0x108] sm:$0xff] 0.0
    %93 = vst [vmem:[#allocation3 + $0x110] sm:$0xff] 0.0
    %94 = vst [vmem:[#allocation3 + $0x118] sm:$0xff] 0.0
    %v95 = vlaneseq
    %v96 = vand.u32 %v95, 127
    %v97 = vadd.s32 %v96, 128
    %vm98 = vcmp.lt.s32.totalorder %v96, 0
    %v99 = vsub.s32 0, %v96
    %v100 = vsel %vm98, %v99, %v96
    %v101 = vshrl.u32 %v100, 4
    %v102 = vand.u32 %v100, 15
    %v103 = vsub.s32 0, %v102
    %v104 = vsel %vm98, %v103, %v102
    %vm105 = vcmp.lt.s32.totalorder %v97, 0
    %v106 = vsub.s32 0, %v97
    %v107 = vsel %vm105, %v106, %v97
    %v108 = vshrl.u32 %v107, 4
    %v109 = vand.u32 %v107, 15
    %v110 = vsub.s32 0, %v109
    %v111 = vsel %vm105, %v110, %v109
    %vm112 = vcmp.ne.s32.totalorder %v104, 0
    %vm113 = vcmp.ne.s32.totalorder %v111, 0
    %vm114 = vcmp.lt.s32.totalorder %v104, 0
    %vm115 = vcmp.lt.s32.totalorder %v111, 0
    %vm116 = vmand %vm114, %vm112
    %vm117 = vmand %vm115, %vm113
    %v118 = vadd.s32 %v104, 16
    %v119 = vadd.s32 %v111, 16
    %v120 = vsel %vm116, %v118, %v104
    %v121 = vsel %vm117, %v119, %v111
    %vm122 = vcmp.ge.s32.totalorder %v120, 1
    %vm123 = vcmp.ge.s32.totalorder %v121, 1
    %vm124 = vcmp.lt.s32.totalorder %v120, 15
    %vm125 = vcmp.lt.s32.totalorder %v121, 15
    %v126 = vld [vmem:[%s6] sm:$0xff]
    %v127 = vld [vmem:[#allocation4] sm:$0xff]
    %v129 = vcombine.high %v127, %v127
    %130 = vrot.lane.b32.xlu0 %v127, 17
    %v131 = vpop.permute.xlu0 %130
    %132 = vrot.lane.b32.xlu0 %v129, 17
    %v133 = vpop.permute.xlu0 %132
    %v134 = vsel %vm55, %v131, %v133
    %vm138 = vcmask 1043592
    %139 = vst.msk [vmem:[#allocation2] sm:$0xf] %vm138, %v131
    %140 = vst [vmem:[#allocation2 + $0x8] sm:$0xf] %v134
    %vm141 = vcmask 134144
    %142 = vst.msk [vmem:[#allocation2 + $0x10] sm:$0xf] %vm141, %v133
    %v143 = vld [vmem:[#allocation2] sm:$0xf]
    %v144 = vld [vmem:[#allocation2 + $0x8] sm:$0xf]
    %v145 = vsel %vm122, %v143, 0.0
    %v146 = vsel %vm123, %v144, 0.0
    %147 = vst [vmem:[#allocation3] sm:$0xf] %v145
    %148 = vst [vmem:[#allocation3 + $0x8] sm:$0xf] %v146
    %v149 = vld [vmem:[#allocation2] sm:$0xf]
    %v150 = vld [vmem:[#allocation2 + $0x8] sm:$0xf]
    %v151 = vld [vmem:[#allocation2 + $0x10] sm:$0xf]
    %155 = vrot.lane.b32.xlu0 %v149, 127
    %v156 = vpop.permute.xlu0 %155
    %157 = vrot.lane.b32.xlu0 %v150, 127
    %v158 = vpop.permute.xlu0 %157
    %159 = vrot.lane.b32.xlu0 %v151, 127
    %v160 = vpop.permute.xlu0 %159
    %vm161 = vcmask 1039360
    %v162 = vsel %vm161, %v156, %v158
    %v163 = vsel %vm161, %v158, %v160
    %166 = vst [vmem:[#allocation3 + $0x20] sm:$0xf] %v162
    %167 = vst [vmem:[#allocation3 + $0x28] sm:$0xf] %v163
    %v168 = vld [vmem:[#allocation2] sm:$0xf]
    %v169 = vld [vmem:[#allocation2 + $0x8] sm:$0xf]
    %v170 = vld [vmem:[#allocation2 + $0x10] sm:$0xf]
    %174 = vrot.lane.b32.xlu0 %v168, 126
    %v175 = vpop.permute.xlu0 %174
    %176 = vrot.lane.b32.xlu0 %v169, 126
    %v177 = vpop.permute.xlu0 %176
    %178 = vrot.lane.b32.xlu0 %v170, 126
    %v179 = vpop.permute.xlu0 %178
    %vm180 = vcmask 1031168
    %v181 = vsel %vm180, %v175, %v177
    %v182 = vsel %vm180, %v177, %v179
    %v185 = vsel %vm124, %v181, 0.0
    %v186 = vsel %vm125, %v182, 0.0
    %187 = vst [vmem:[#allocation3 + $0x40] sm:$0xf] %v185
    %188 = vst [vmem:[#allocation3 + $0x48] sm:$0xf] %v186
    %v189 = vld [vmem:[#allocation2] sm:$0xf]
    %v190 = vld [vmem:[#allocation2 + $0x8] sm:$0xf]
    %v191 = vld [vmem:[#allocation2 + $0x10] sm:$0xf]
    %195 = vrot.lane.b32.xlu0 %v189, 112
    %v196 = vpop.permute.xlu0 %195
    %197 = vrot.lane.b32.xlu0 %v190, 112
    %v198 = vpop.permute.xlu0 %197
    %199 = vrot.lane.b32.xlu0 %v191, 112
    %v200 = vpop.permute.xlu0 %199
    %vm201 = vcmask 916480
    %v202 = vsel %vm201, %v196, %v198
    %v203 = vsel %vm201, %v198, %v200
    %v206 = vsel %vm122, %v202, 0.0
    %v207 = vsel %vm123, %v203, 0.0
    %208 = vst [vmem:[#allocation3 + $0x60] sm:$0xf] %v206
    %209 = vst [vmem:[#allocation3 + $0x68] sm:$0xf] %v207
    %v210 = vld [vmem:[#allocation2] sm:$0xf]
    %v211 = vld [vmem:[#allocation2 + $0x8] sm:$0xf]
    %v212 = vld [vmem:[#allocation2 + $0x10] sm:$0xf]
    %216 = vrot.lane.b32.xlu0 %v210, 111
    %v217 = vpop.permute.xlu0 %216
    %218 = vrot.lane.b32.xlu0 %v211, 111
    %v219 = vpop.permute.xlu0 %218
    %220 = vrot.lane.b32.xlu0 %v212, 111
    %v221 = vpop.permute.xlu0 %220
    %vm222 = vcmask 908288
    %v223 = vsel %vm222, %v217, %v219
    %v224 = vsel %vm222, %v219, %v221
    %227 = vst [vmem:[#allocation3 + $0x80] sm:$0xf] %v223
    %228 = vst [vmem:[#allocation3 + $0x88] sm:$0xf] %v224
    %v229 = vld [vmem:[#allocation2] sm:$0xf]
    %v230 = vld [vmem:[#allocation2 + $0x8] sm:$0xf]
    %v231 = vld [vmem:[#allocation2 + $0x10] sm:$0xf]
    %235 = vrot.lane.b32.xlu0 %v229, 110
    %v236 = vpop.permute.xlu0 %235
    %237 = vrot.lane.b32.xlu0 %v230, 110
    %v238 = vpop.permute.xlu0 %237
    %239 = vrot.lane.b32.xlu0 %v231, 110
    %v240 = vpop.permute.xlu0 %239
    %vm241 = vcmask 900096
    %v242 = vsel %vm241, %v236, %v238
    %v243 = vsel %vm241, %v238, %v240
    %v246 = vsel %vm124, %v242, 0.0
    %v247 = vsel %vm125, %v243, 0.0
    %248 = vst [vmem:[#allocation3 + $0xa0] sm:$0xf] %v246
    %249 = vst [vmem:[#allocation3 + $0xa8] sm:$0xf] %v247
    %v250 = vld [vmem:[#allocation2] sm:$0xf]
    %v251 = vld [vmem:[#allocation2 + $0x8] sm:$0xf]
    %v252 = vld [vmem:[#allocation2 + $0x10] sm:$0xf]
    %256 = vrot.lane.b32.xlu0 %v250, 96
    %v257 = vpop.permute.xlu0 %256
    %258 = vrot.lane.b32.xlu0 %v251, 96
    %v259 = vpop.permute.xlu0 %258
    %260 = vrot.lane.b32.xlu0 %v252, 96
    %v261 = vpop.permute.xlu0 %260
    %vm262 = vcmask 785408
    %v263 = vsel %vm262, %v257, %v259
    %v264 = vsel %vm262, %v259, %v261
    %v267 = vsel %vm122, %v263, 0.0
    %v268 = vsel %vm123, %v264, 0.0
    %269 = vst [vmem:[#allocation3 + $0xc0] sm:$0xf] %v267
    %270 = vst [vmem:[#allocation3 + $0xc8] sm:$0xf] %v268
    %v271 = vld [vmem:[#allocation2] sm:$0xf]
    %v272 = vld [vmem:[#allocation2 + $0x8] sm:$0xf]
    %v273 = vld [vmem:[#allocation2 + $0x10] sm:$0xf]
    %277 = vrot.lane.b32.xlu0 %v271, 95
    %v278 = vpop.permute.xlu0 %277
    %279 = vrot.lane.b32.xlu0 %v272, 95
    %v280 = vpop.permute.xlu0 %279
    %281 = vrot.lane.b32.xlu0 %v273, 95
    %v282 = vpop.permute.xlu0 %281
    %vm283 = vcmask 777216
    %v284 = vsel %vm283, %v278, %v280
    %v285 = vsel %vm283, %v280, %v282
    %288 = vst [vmem:[#allocation3 + $0xe0] sm:$0xf] %v284
    %289 = vst [vmem:[#allocation3 + $0xe8] sm:$0xf] %v285
    %v290 = vld [vmem:[#allocation2] sm:$0xf]
    %v291 = vld [vmem:[#allocation2 + $0x8] sm:$0xf]
    %v292 = vld [vmem:[#allocation2 + $0x10] sm:$0xf]
    %296 = vrot.lane.b32.xlu0 %v290, 94
    %v297 = vpop.permute.xlu0 %296
    %298 = vrot.lane.b32.xlu0 %v291, 94
    %v299 = vpop.permute.xlu0 %298
    %300 = vrot.lane.b32.xlu0 %v292, 94
    %v301 = vpop.permute.xlu0 %300
    %vm302 = vcmask 769024
    %v303 = vsel %vm302, %v297, %v299
    %v304 = vsel %vm302, %v299, %v301
    %v307 = vsel %vm124, %v303, 0.0
    %v308 = vsel %vm125, %v304, 0.0
    %309 = vst [vmem:[#allocation3 + $0x100] sm:$0xf] %v307
    %310 = vst [vmem:[#allocation3 + $0x108] sm:$0xf] %v308
    %s311 = scalar_lea.vmem [#allocation4], 8
    %v312 = vld [vmem:[%s311] sm:$0xff]
    %v314 = vcombine.high %v312, %v312
    %315 = vrot.lane.b32.xlu0 %v312, 17
    %v316 = vpop.permute.xlu0 %315
    %317 = vrot.lane.b32.xlu0 %v314, 17
    %v318 = vpop.permute.xlu0 %317
    %v319 = vsel %vm55, %v316, %v318
    %323 = vst.msk [vmem:[#allocation2] sm:$0xf] %vm138, %v316
    %324 = vst [vmem:[#allocation2 + $0x8] sm:$0xf] %v319
    %325 = vst.msk [vmem:[#allocation2 + $0x10] sm:$0xf] %vm141, %v318
    %v326 = vld [vmem:[#allocation2] sm:$0xf]
    %v327 = vld [vmem:[#allocation2 + $0x8] sm:$0xf]
    %v328 = vsel %vm122, %v326, 0.0
    %v329 = vsel %vm123, %v327, 0.0
    %330 = vst [vmem:[#allocation3 + $0x10] sm:$0xf] %v328
    %331 = vst [vmem:[#allocation3 + $0x18] sm:$0xf] %v329
    %v332 = vld [vmem:[#allocation2] sm:$0xf]
    %v333 = vld [vmem:[#allocation2 + $0x8] sm:$0xf]
    %v334 = vld [vmem:[#allocation2 + $0x10] sm:$0xf]
    %338 = vrot.lane.b32.xlu0 %v332, 127
    %v339 = vpop.permute.xlu0 %338
    %340 = vrot.lane.b32.xlu0 %v333, 127
    %v341 = vpop.permute.xlu0 %340
    %342 = vrot.lane.b32.xlu0 %v334, 127
    %v343 = vpop.permute.xlu0 %342
    %v344 = vsel %vm161, %v339, %v341
    %v345 = vsel %vm161, %v341, %v343
    %348 = vst [vmem:[#allocation3 + $0x30] sm:$0xf] %v344
    %349 = vst [vmem:[#allocation3 + $0x38] sm:$0xf] %v345
    %v350 = vld [vmem:[#allocation2] sm:$0xf]
    %v351 = vld [vmem:[#allocation2 + $0x8] sm:$0xf]
    %v352 = vld [vmem:[#allocation2 + $0x10] sm:$0xf]
    %356 = vrot.lane.b32.xlu0 %v350, 126
    %v357 = vpop.permute.xlu0 %356
    %358 = vrot.lane.b32.xlu0 %v351, 126
    %v359 = vpop.permute.xlu0 %358
    %360 = vrot.lane.b32.xlu0 %v352, 126
    %v361 = vpop.permute.xlu0 %360
    %v362 = vsel %vm180, %v357, %v359
    %v363 = vsel %vm180, %v359, %v361
    %v366 = vsel %vm124, %v362, 0.0
    %v367 = vsel %vm125, %v363, 0.0
    %368 = vst [vmem:[#allocation3 + $0x50] sm:$0xf] %v366
    %369 = vst [vmem:[#allocation3 + $0x58] sm:$0xf] %v367
    %v370 = vld [vmem:[#allocation2] sm:$0xf]
    %v371 = vld [vmem:[#allocation2 + $0x8] sm:$0xf]
    %v372 = vld [vmem:[#allocation2 + $0x10] sm:$0xf]
    %376 = vrot.lane.b32.xlu0 %v370, 112
    %v377 = vpop.permute.xlu0 %376
    %378 = vrot.lane.b32.xlu0 %v371, 112
    %v379 = vpop.permute.xlu0 %378
    %380 = vrot.lane.b32.xlu0 %v372, 112
    %v381 = vpop.permute.xlu0 %380
    %v382 = vsel %vm201, %v377, %v379
    %v383 = vsel %vm201, %v379, %v381
    %v386 = vsel %vm122, %v382, 0.0
    %v387 = vsel %vm123, %v383, 0.0
    %388 = vst [vmem:[#allocation3 + $0x70] sm:$0xf] %v386
    %389 = vst [vmem:[#allocation3 + $0x78] sm:$0xf] %v387
    %v390 = vld [vmem:[#allocation2] sm:$0xf]
    %v391 = vld [vmem:[#allocation2 + $0x8] sm:$0xf]
    %v392 = vld [vmem:[#allocation2 + $0x10] sm:$0xf]
    %396 = vrot.lane.b32.xlu0 %v390, 111
    %v397 = vpop.permute.xlu0 %396
    %398 = vrot.lane.b32.xlu0 %v391, 111
    %v399 = vpop.permute.xlu0 %398
    %400 = vrot.lane.b32.xlu0 %v392, 111
    %v401 = vpop.permute.xlu0 %400
    %v402 = vsel %vm222, %v397, %v399
    %v403 = vsel %vm222, %v399, %v401
    %406 = vst [vmem:[#allocation3 + $0x90] sm:$0xf] %v402
    %407 = vst [vmem:[#allocation3 + $0x98] sm:$0xf] %v403
    %v408 = vld [vmem:[#allocation2] sm:$0xf]
    %v409 = vld [vmem:[#allocation2 + $0x8] sm:$0xf]
    %v410 = vld [vmem:[#allocation2 + $0x10] sm:$0xf]
    %414 = vrot.lane.b32.xlu0 %v408, 110
    %v415 = vpop.permute.xlu0 %414
    %416 = vrot.lane.b32.xlu0 %v409, 110
    %v417 = vpop.permute.xlu0 %416
    %418 = vrot.lane.b32.xlu0 %v410, 110
    %v419 = vpop.permute.xlu0 %418
    %v420 = vsel %vm241, %v415, %v417
    %v421 = vsel %vm241, %v417, %v419
    %v424 = vsel %vm124, %v420, 0.0
    %v425 = vsel %vm125, %v421, 0.0
    %426 = vst [vmem:[#allocation3 + $0xb0] sm:$0xf] %v424
    %427 = vst [vmem:[#allocation3 + $0xb8] sm:$0xf] %v425
    %v428 = vld [vmem:[#allocation2] sm:$0xf]
    %v429 = vld [vmem:[#allocation2 + $0x8] sm:$0xf]
    %v430 = vld [vmem:[#allocation2 + $0x10] sm:$0xf]
    %434 = vrot.lane.b32.xlu0 %v428, 96
    %v435 = vpop.permute.xlu0 %434
    %436 = vrot.lane.b32.xlu0 %v429, 96
    %v437 = vpop.permute.xlu0 %436
    %438 = vrot.lane.b32.xlu0 %v430, 96
    %v439 = vpop.permute.xlu0 %438
    %v440 = vsel %vm262, %v435, %v437
    %v441 = vsel %vm262, %v437, %v439
    %v444 = vsel %vm122, %v440, 0.0
    %v445 = vsel %vm123, %v441, 0.0
    %446 = vst [vmem:[#allocation3 + $0xd0] sm:$0xf] %v444
    %447 = vst [vmem:[#allocation3 + $0xd8] sm:$0xf] %v445
    %v448 = vld [vmem:[#allocation2] sm:$0xf]
    %v449 = vld [vmem:[#allocation2 + $0x8] sm:$0xf]
    %v450 = vld [vmem:[#allocation2 + $0x10] sm:$0xf]
    %454 = vrot.lane.b32.xlu0 %v448, 95
    %v455 = vpop.permute.xlu0 %454
    %456 = vrot.lane.b32.xlu0 %v449, 95
    %v457 = vpop.permute.xlu0 %456
    %458 = vrot.lane.b32.xlu0 %v450, 95
    %v459 = vpop.permute.xlu0 %458
    %v460 = vsel %vm283, %v455, %v457
    %v461 = vsel %vm283, %v457, %v459
    %464 = vst [vmem:[#allocation3 + $0xf0] sm:$0xf] %v460
    %465 = vst [vmem:[#allocation3 + $0xf8] sm:$0xf] %v461
    %v466 = vld [vmem:[#allocation2] sm:$0xf]
    %v467 = vld [vmem:[#allocation2 + $0x8] sm:$0xf]
    %v468 = vld [vmem:[#allocation2 + $0x10] sm:$0xf]
    %472 = vrot.lane.b32.xlu0 %v466, 94
    %v473 = vpop.permute.xlu0 %472
    %474 = vrot.lane.b32.xlu0 %v467, 94
    %v475 = vpop.permute.xlu0 %474
    %476 = vrot.lane.b32.xlu0 %v468, 94
    %v477 = vpop.permute.xlu0 %476
    %v478 = vsel %vm302, %v473, %v475
    %v479 = vsel %vm302, %v475, %v477
    %v482 = vsel %vm124, %v478, 0.0
    %v483 = vsel %vm125, %v479, 0.0
    %484 = vst [vmem:[#allocation3 + $0x110] sm:$0xf] %v482
    %485 = vst [vmem:[#allocation3 + $0x118] sm:$0xf] %v483
    %v486 = vld [vmem:[#allocation7] sm:$0xff]
    %v487 = vld [vmem:[#allocation7 + $0x8] sm:$0xff]
    %v488 = vld [vmem:[#allocation3] sm:$0xff]
    %v489 = vld [vmem:[#allocation3 + $0x8] sm:$0xff]
    %v490 = vld [vmem:[#allocation3 + $0x10] sm:$0xff]
    %v491 = vld [vmem:[#allocation3 + $0x18] sm:$0xff]
    %v492 = vld [vmem:[#allocation3 + $0x20] sm:$0xff]
    %v493 = vld [vmem:[#allocation3 + $0x28] sm:$0xff]
    %v494 = vld [vmem:[#allocation3 + $0x30] sm:$0xff]
    %v495 = vld [vmem:[#allocation3 + $0x38] sm:$0xff]
    %v496 = vld [vmem:[#allocation3 + $0x40] sm:$0xff]
    %v497 = vld [vmem:[#allocation3 + $0x48] sm:$0xff]
    %v498 = vld [vmem:[#allocation3 + $0x50] sm:$0xff]
    %v499 = vld [vmem:[#allocation3 + $0x58] sm:$0xff]
    %v500 = vld [vmem:[#allocation3 + $0x60] sm:$0xff]
    %v501 = vld [vmem:[#allocation3 + $0x68] sm:$0xff]
    %v502 = vld [vmem:[#allocation3 + $0x70] sm:$0xff]
    %v503 = vld [vmem:[#allocation3 + $0x78] sm:$0xff]
    %v504 = vld [vmem:[#allocation3 + $0x80] sm:$0xff]
    %v505 = vld [vmem:[#allocation3 + $0x88] sm:$0xff]
    %v506 = vld [vmem:[#allocation3 + $0x90] sm:$0xff]
    %v507 = vld [vmem:[#allocation3 + $0x98] sm:$0xff]
    %v508 = vld [vmem:[#allocation3 + $0xa0] sm:$0xff]
    %v509 = vld [vmem:[#allocation3 + $0xa8] sm:$0xff]
    %v510 = vld [vmem:[#allocation3 + $0xb0] sm:$0xff]
    %v511 = vld [vmem:[#allocation3 + $0xb8] sm:$0xff]
    %v512 = vld [vmem:[#allocation3 + $0xc0] sm:$0xff]
    %v513 = vld [vmem:[#allocation3 + $0xc8] sm:$0xff]
    %v514 = vld [vmem:[#allocation3 + $0xd0] sm:$0xff]
    %v515 = vld [vmem:[#allocation3 + $0xd8] sm:$0xff]
    %v516 = vld [vmem:[#allocation3 + $0xe0] sm:$0xff]
    %v517 = vld [vmem:[#allocation3 + $0xe8] sm:$0xff]
    %v518 = vld [vmem:[#allocation3 + $0xf0] sm:$0xff]
    %v519 = vld [vmem:[#allocation3 + $0xf8] sm:$0xff]
    %v520 = vld [vmem:[#allocation3 + $0x100] sm:$0xff]
    %v521 = vld [vmem:[#allocation3 + $0x108] sm:$0xff]
    %v522 = vld [vmem:[#allocation3 + $0x110] sm:$0xff]
    %v523 = vld [vmem:[#allocation3 + $0x118] sm:$0xff]
    %vm524 = vcmask 588800
    %v526 = vsel %vm524, %v486, 0
    %v529 = vsel %vm524, %v487, 0
    %531 = vmatprep.subr.mxu0 %v489
    %532 = vmatpush1.msra.mxu0 %v488
    %533 = vmatprep.subr.mxu0 %v493
    %534 = vmatpush1.msra.mxu0 %v492
    %535 = vmatprep.subr.mxu0 %v497
    %536 = vmatpush1.msra.mxu0 %v496
    %537 = vmatprep.subr.mxu0 %v501
    %538 = vmatpush1.msra.mxu0 %v500
    %539 = vmatprep.subr.mxu0 %v505
    %540 = vmatpush1.msra.mxu0 %v504
    %541 = vmatprep.subr.mxu0 %v509
    %542 = vmatpush1.msra.mxu0 %v508
    %543 = vmatprep.subr.mxu0 %v513
    %544 = vmatpush1.msra.mxu0 %v512
    %545 = vmatprep.subr.mxu0 %v517
    %546 = vmatpush1.msra.mxu0 %v516
    %547 = vmatprep.subr.mxu0 %v521
    %548 = vmatpush1.msra.mxu0 %v520
    %549 = vmatprep.subr.mxu0 0.0
    %550 = vmatpush1.msra.mxu0 0.0
    %551 = vmatprep.subr.mxu0 0.0
    %552 = vmatpush1.msra.mxu0 0.0
    %553 = vmatprep.subr.mxu0 0.0
    %554 = vmatpush1.msra.mxu0 0.0
    %555 = vmatprep.subr.mxu0 0.0
    %556 = vmatpush1.msra.mxu0 0.0
    %557 = vmatprep.subr.mxu0 0.0
    %558 = vmatpush1.msra.mxu0 0.0
    %559 = vmatprep.subr.mxu0 0.0
    %560 = vmatpush1.msra.mxu0 0.0
    %561 = vmatprep.subr.mxu0 0.0
    %562 = vmatpush1.msra.mxu0 0.0
    %563 = vmatprep.subr.mxu0 0.0
    %564 = vmatpush1.msra.mxu0 0.0
    %565 = vmatprep.subr.mxu0 0.0
    %566 = vmatpush1.msra.mxu0 0.0
    %567 = vmatprep.subr.mxu0 0.0
    %568 = vmatpush1.msra.mxu0 0.0
    %569 = vmatprep.subr.mxu0 0.0
    %570 = vmatpush1.msra.mxu0 0.0
    %571 = vmatprep.subr.mxu0 0.0
    %572 = vmatpush1.msra.mxu0 0.0
    %573 = vmatprep.subr.mxu0 0.0
    %574 = vmatpush1.msra.mxu0 0.0
    %575 = vmatprep.subr.mxu0 0.0
    %576 = vmatpush1.msra.mxu0 0.0
    %577 = vmatprep.subr.mxu0 0.0
    %578 = vmatpush1.msra.mxu0 0.0
    %579 = vmatprep.subr.mxu0 0.0
    %580 = vmatpush1.msra.mxu0 0.0
    %581 = vmatprep.subr.mxu0 0.0
    %582 = vmatpush1.msra.mxu0 0.0
    %583 = vmatprep.subr.mxu0 0.0
    %584 = vmatpush1.msra.mxu0 0.0
    %585 = vmatprep.subr.mxu0 0.0
    %586 = vmatpush1.msra.mxu0 0.0
    %587 = vmatprep.subr.mxu0 0.0
    %588 = vmatpush1.msra.mxu0 0.0
    %589 = vmatprep.subr.mxu0 0.0
    %590 = vmatpush1.msra.mxu0 0.0
    %591 = vmatprep.subr.mxu0 0.0
    %592 = vmatpush1.msra.mxu0 0.0
    %593 = vmatprep.subr.mxu0 0.0
    %594 = vmatpush1.msra.mxu0 0.0
    %595 = vmatprep.mubr.f32.mxu0 0.0
    %596 = vmatmul.mubr.f32.gmra.mrb[0].mxu0 %v526
    %v597 = vpop.f32.mrb[0].mxu0
    %v598 = vadd.f32 0.0, %v597
    %v599 = vpop.f32.mrb[0].mxu0
    %v600 = vadd.f32 0.0, %v599
    %601 = vmatprep.mubr.f32.mxu0 0.0
    %602 = vmatmul.mubr.f32.gmra.mrb[0].mxu0 %v529
    %v603 = vpop.f32.mrb[0].mxu0
    %v604 = vadd.f32 0.0, %v603
    %v605 = vpop.f32.mrb[0].mxu0
    %v606 = vadd.f32 0.0, %v605
    %607 = vdwg.mxu0
    %608 = vmatprep.subr.mxu0 %v491
    %609 = vmatpush1.msra.mxu0 %v490
    %610 = vmatprep.subr.mxu0 %v495
    %611 = vmatpush1.msra.mxu0 %v494
    %612 = vmatprep.subr.mxu0 %v499
    %613 = vmatpush1.msra.mxu0 %v498
    %614 = vmatprep.subr.mxu0 %v503
    %615 = vmatpush1.msra.mxu0 %v502
    %616 = vmatprep.subr.mxu0 %v507
    %617 = vmatpush1.msra.mxu0 %v506
    %618 = vmatprep.subr.mxu0 %v511
    %619 = vmatpush1.msra.mxu0 %v510
    %620 = vmatprep.subr.mxu0 %v515
    %621 = vmatpush1.msra.mxu0 %v514
    %622 = vmatprep.subr.mxu0 %v519
    %623 = vmatpush1.msra.mxu0 %v518
    %624 = vmatprep.subr.mxu0 %v523
    %625 = vmatpush1.msra.mxu0 %v522
    %626 = vmatprep.subr.mxu0 0.0
    %627 = vmatpush1.msra.mxu0 0.0
    %628 = vmatprep.subr.mxu0 0.0
    %629 = vmatpush1.msra.mxu0 0.0
    %630 = vmatprep.subr.mxu0 0.0
    %631 = vmatpush1.msra.mxu0 0.0
    %632 = vmatprep.subr.mxu0 0.0
    %633 = vmatpush1.msra.mxu0 0.0
    %634 = vmatprep.subr.mxu0 0.0
    %635 = vmatpush1.msra.mxu0 0.0
    %636 = vmatprep.subr.mxu0 0.0
    %637 = vmatpush1.msra.mxu0 0.0
    %638 = vmatprep.subr.mxu0 0.0
    %639 = vmatpush1.msra.mxu0 0.0
    %640 = vmatprep.subr.mxu0 0.0
    %641 = vmatpush1.msra.mxu0 0.0
    %642 = vmatprep.subr.mxu0 0.0
    %643 = vmatpush1.msra.mxu0 0.0
    %644 = vmatprep.subr.mxu0 0.0
    %645 = vmatpush1.msra.mxu0 0.0
    %646 = vmatprep.subr.mxu0 0.0
    %647 = vmatpush1.msra.mxu0 0.0
    %648 = vmatprep.subr.mxu0 0.0
    %649 = vmatpush1.msra.mxu0 0.0
    %650 = vmatprep.subr.mxu0 0.0
    %651 = vmatpush1.msra.mxu0 0.0
    %652 = vmatprep.subr.mxu0 0.0
    %653 = vmatpush1.msra.mxu0 0.0
    %654 = vmatprep.subr.mxu0 0.0
    %655 = vmatpush1.msra.mxu0 0.0
    %656 = vmatprep.subr.mxu0 0.0
    %657 = vmatpush1.msra.mxu0 0.0
    %658 = vmatprep.subr.mxu0 0.0
    %659 = vmatpush1.msra.mxu0 0.0
    %660 = vmatprep.subr.mxu0 0.0
    %661 = vmatpush1.msra.mxu0 0.0
    %662 = vmatprep.subr.mxu0 0.0
    %663 = vmatpush1.msra.mxu0 0.0
    %664 = vmatprep.subr.mxu0 0.0
    %665 = vmatpush1.msra.mxu0 0.0
    %666 = vmatprep.subr.mxu0 0.0
    %667 = vmatpush1.msra.mxu0 0.0
    %668 = vmatprep.subr.mxu0 0.0
    %669 = vmatpush1.msra.mxu0 0.0
    %670 = vmatprep.subr.mxu0 0.0
    %671 = vmatpush1.msra.mxu0 0.0
    %672 = vmatprep.mubr.f32.mxu0 0.0
    %673 = vmatmul.mubr.f32.gmra.mrb[0].mxu0 %v526
    %v674 = vpop.f32.mrb[0].mxu0
    %v675 = vadd.f32 0.0, %v674
    %v676 = vpop.f32.mrb[0].mxu0
    %v677 = vadd.f32 0.0, %v676
    %678 = vmatprep.mubr.f32.mxu0 0.0
    %679 = vmatmul.mubr.f32.gmra.mrb[0].mxu0 %v529
    %v680 = vpop.f32.mrb[0].mxu0
    %v681 = vadd.f32 0.0, %v680
    %v682 = vpop.f32.mrb[0].mxu0
    %v683 = vadd.f32 0.0, %v682
    %684 = vdwg.mxu0
    %686 = vset.pattern.permute.xlu0 0
    %687 = vperm.xlu0 %686, %v126
    %v688 = vpop.permute.xlu0 %687
    %v690 = vadd.f32 %v598, %v688
    %v691 = vadd.f32 %v600, %v688
    %v692 = vadd.f32 %v675, %v688
    %v693 = vadd.f32 %v677, %v688
    %vm694 = vcmp.ge.f32.partialorder %v690, 0.0
    %vm695 = vcmp.ge.f32.partialorder %v691, 0.0
    %vm696 = vcmp.ge.f32.partialorder %v692, 0.0
    %vm697 = vcmp.ge.f32.partialorder %v693, 0.0
    %v698 = vmul.f32 %v690, 0.2
    %v699 = vmul.f32 %v691, 0.2
    %v700 = vmul.f32 %v692, 0.2
    %v701 = vmul.f32 %v693, 0.2
    %v702 = vsel %vm694, %v690, %v698
    %v703 = vsel %vm695, %v691, %v699
    %v704 = vsel %vm696, %v692, %v700
    %v705 = vsel %vm697, %v693, %v701
    %706 = vset.pattern.permute.xlu0 2
    %707 = vperm.xlu0 %706, %v126
    %v708 = vpop.permute.xlu0 %707
    %v710 = vadd.f32 %v604, %v708
    %v711 = vadd.f32 %v606, %v708
    %v712 = vadd.f32 %v681, %v708
    %v713 = vadd.f32 %v683, %v708
    %716 = vrot.lane.b32.xlu0 %v702, 17
    %v717 = vpop.permute.xlu0 %716
    %718 = vrot.lane.b32.xlu0 %v703, 17
    %v719 = vpop.permute.xlu0 %718
    %v720 = vsel %vm55, %v717, %v719
    %vm724 = vcmask 1047688
    %725 = vst.msk [vmem:[#allocation2] sm:$0xff] %vm724, %v717
    %726 = vst [vmem:[#allocation2 + $0x8] sm:$0xff] %v720
    %727 = vst.msk [vmem:[#allocation2 + $0x10] sm:$0xff] %vm55, %v719
    %v728 = vld [vmem:[#allocation2] sm:$0xff]
    %v729 = vld [vmem:[#allocation2 + $0x8] sm:$0xff]
    %v730 = vsel %vm122, %v728, 0.0
    %v731 = vsel %vm123, %v729, 0.0
    %732 = vst [vmem:[#allocation3] sm:$0xff] %v730
    %733 = vst [vmem:[#allocation3 + $0x8] sm:$0xff] %v731
    %v734 = vld [vmem:[#allocation2] sm:$0xff]
    %v735 = vld [vmem:[#allocation2 + $0x8] sm:$0xff]
    %v736 = vld [vmem:[#allocation2 + $0x10] sm:$0xff]
    %740 = vrot.lane.b32.xlu0 %v734, 127
    %v741 = vpop.permute.xlu0 %740
    %742 = vrot.lane.b32.xlu0 %v735, 127
    %v743 = vpop.permute.xlu0 %742
    %744 = vrot.lane.b32.xlu0 %v736, 127
    %v745 = vpop.permute.xlu0 %744
    %v746 = vsel %vm161, %v741, %v743
    %v747 = vsel %vm161, %v743, %v745
    %750 = vst [vmem:[#allocation3 + $0x20] sm:$0xff] %v746
    %751 = vst [vmem:[#allocation3 + $0x28] sm:$0xff] %v747
    %v752 = vld [vmem:[#allocation2] sm:$0xff]
    %v753 = vld [vmem:[#allocation2 + $0x8] sm:$0xff]
    %v754 = vld [vmem:[#allocation2 + $0x10] sm:$0xff]
    %758 = vrot.lane.b32.xlu0 %v752, 126
    %v759 = vpop.permute.xlu0 %758
    %760 = vrot.lane.b32.xlu0 %v753, 126
    %v761 = vpop.permute.xlu0 %760
    %762 = vrot.lane.b32.xlu0 %v754, 126
    %v763 = vpop.permute.xlu0 %762
    %v764 = vsel %vm180, %v759, %v761
    %v765 = vsel %vm180, %v761, %v763
    %v768 = vsel %vm124, %v764, 0.0
    %v769 = vsel %vm125, %v765, 0.0
    %770 = vst [vmem:[#allocation3 + $0x40] sm:$0xff] %v768
    %771 = vst [vmem:[#allocation3 + $0x48] sm:$0xff] %v769
    %v772 = vld [vmem:[#allocation2] sm:$0xff]
    %v773 = vld [vmem:[#allocation2 + $0x8] sm:$0xff]
    %v774 = vld [vmem:[#allocation2 + $0x10] sm:$0xff]
    %778 = vrot.lane.b32.xlu0 %v772, 112
    %v779 = vpop.permute.xlu0 %778
    %780 = vrot.lane.b32.xlu0 %v773, 112
    %v781 = vpop.permute.xlu0 %780
    %782 = vrot.lane.b32.xlu0 %v774, 112
    %v783 = vpop.permute.xlu0 %782
    %v784 = vsel %vm201, %v779, %v781
    %v785 = vsel %vm201, %v781, %v783
    %v788 = vsel %vm122, %v784, 0.0
    %v789 = vsel %vm123, %v785, 0.0
    %790 = vst [vmem:[#allocation3 + $0x60] sm:$0xff] %v788
    %791 = vst [vmem:[#allocation3 + $0x68] sm:$0xff] %v789
    %v792 = vld [vmem:[#allocation2] sm:$0xff]
    %v793 = vld [vmem:[#allocation2 + $0x8] sm:$0xff]
    %v794 = vld [vmem:[#allocation2 + $0x10] sm:$0xff]
    %798 = vrot.lane.b32.xlu0 %v792, 111
    %v799 = vpop.permute.xlu0 %798
    %800 = vrot.lane.b32.xlu0 %v793, 111
    %v801 = vpop.permute.xlu0 %800
    %802 = vrot.lane.b32.xlu0 %v794, 111
    %v803 = vpop.permute.xlu0 %802
    %v804 = vsel %vm222, %v799, %v801
    %v805 = vsel %vm222, %v801, %v803
    %808 = vst [vmem:[#allocation3 + $0x80] sm:$0xff] %v804
    %809 = vst [vmem:[#allocation3 + $0x88] sm:$0xff] %v805
    %v810 = vld [vmem:[#allocation2] sm:$0xff]
    %v811 = vld [vmem:[#allocation2 + $0x8] sm:$0xff]
    %v812 = vld [vmem:[#allocation2 + $0x10] sm:$0xff]
    %816 = vrot.lane.b32.xlu0 %v810, 110
    %v817 = vpop.permute.xlu0 %816
    %818 = vrot.lane.b32.xlu0 %v811, 110
    %v819 = vpop.permute.xlu0 %818
    %820 = vrot.lane.b32.xlu0 %v812, 110
    %v821 = vpop.permute.xlu0 %820
    %v822 = vsel %vm241, %v817, %v819
    %v823 = vsel %vm241, %v819, %v821
    %v826 = vsel %vm124, %v822, 0.0
    %v827 = vsel %vm125, %v823, 0.0
    %828 = vst [vmem:[#allocation3 + $0xa0] sm:$0xff] %v826
    %829 = vst [vmem:[#allocation3 + $0xa8] sm:$0xff] %v827
    %v830 = vld [vmem:[#allocation2] sm:$0xff]
    %v831 = vld [vmem:[#allocation2 + $0x8] sm:$0xff]
    %v832 = vld [vmem:[#allocation2 + $0x10] sm:$0xff]
    %836 = vrot.lane.b32.xlu0 %v830, 96
    %v837 = vpop.permute.xlu0 %836
    %838 = vrot.lane.b32.xlu0 %v831, 96
    %v839 = vpop.permute.xlu0 %838
    %840 = vrot.lane.b32.xlu0 %v832, 96
    %v841 = vpop.permute.xlu0 %840
    %v842 = vsel %vm262, %v837, %v839
    %v843 = vsel %vm262, %v839, %v841
    %v846 = vsel %vm122, %v842, 0.0
    %v847 = vsel %vm123, %v843, 0.0
    %848 = vst [vmem:[#allocation3 + $0xc0] sm:$0xff] %v846
    %849 = vst [vmem:[#allocation3 + $0xc8] sm:$0xff] %v847
    %v850 = vld [vmem:[#allocation2] sm:$0xff]
    %v851 = vld [vmem:[#allocation2 + $0x8] sm:$0xff]
    %v852 = vld [vmem:[#allocation2 + $0x10] sm:$0xff]
    %856 = vrot.lane.b32.xlu0 %v850, 95
    %v857 = vpop.permute.xlu0 %856
    %858 = vrot.lane.b32.xlu0 %v851, 95
    %v859 = vpop.permute.xlu0 %858
    %860 = vrot.lane.b32.xlu0 %v852, 95
    %v861 = vpop.permute.xlu0 %860
    %v862 = vsel %vm283, %v857, %v859
    %v863 = vsel %vm283, %v859, %v861
    %866 = vst [vmem:[#allocation3 + $0xe0] sm:$0xff] %v862
    %867 = vst [vmem:[#allocation3 + $0xe8] sm:$0xff] %v863
    %v868 = vld [vmem:[#allocation2] sm:$0xff]
    %v869 = vld [vmem:[#allocation2 + $0x8] sm:$0xff]
    %v870 = vld [vmem:[#allocation2 + $0x10] sm:$0xff]
    %874 = vrot.lane.b32.xlu0 %v868, 94
    %v875 = vpop.permute.xlu0 %874
    %876 = vrot.lane.b32.xlu0 %v869, 94
    %v877 = vpop.permute.xlu0 %876
    %878 = vrot.lane.b32.xlu0 %v870, 94
    %v879 = vpop.permute.xlu0 %878
    %v880 = vsel %vm302, %v875, %v877
    %v881 = vsel %vm302, %v877, %v879
    %v884 = vsel %vm124, %v880, 0.0
    %v885 = vsel %vm125, %v881, 0.0
    %886 = vst [vmem:[#allocation3 + $0x100] sm:$0xff] %v884
    %887 = vst [vmem:[#allocation3 + $0x108] sm:$0xff] %v885
    %890 = vrot.lane.b32.xlu0 %v704, 17
    %v891 = vpop.permute.xlu0 %890
    %892 = vrot.lane.b32.xlu0 %v705, 17
    %v893 = vpop.permute.xlu0 %892
    %v894 = vsel %vm55, %v891, %v893
    %898 = vst.msk [vmem:[#allocation2] sm:$0xff] %vm724, %v891
    %899 = vst [vmem:[#allocation2 + $0x8] sm:$0xff] %v894
    %900 = vst.msk [vmem:[#allocation2 + $0x10] sm:$0xff] %vm55, %v893
    %v901 = vld [vmem:[#allocation2] sm:$0xff]
    %v902 = vld [vmem:[#allocation2 + $0x8] sm:$0xff]
    %v903 = vsel %vm122, %v901, 0.0
    %v904 = vsel %vm123, %v902, 0.0
    %905 = vst [vmem:[#allocation3 + $0x10] sm:$0xff] %v903
    %906 = vst [vmem:[#allocation3 + $0x18] sm:$0xff] %v904
    %v907 = vld [vmem:[#allocation2] sm:$0xff]
    %v908 = vld [vmem:[#allocation2 + $0x8] sm:$0xff]
    %v909 = vld [vmem:[#allocation2 + $0x10] sm:$0xff]
    %913 = vrot.lane.b32.xlu0 %v907, 127
    %v914 = vpop.permute.xlu0 %913
    %915 = vrot.lane.b32.xlu0 %v908, 127
    %v916 = vpop.permute.xlu0 %915
    %917 = vrot.lane.b32.xlu0 %v909, 127
    %v918 = vpop.permute.xlu0 %917
    %v919 = vsel %vm161, %v914, %v916
    %v920 = vsel %vm161, %v916, %v918
    %923 = vst [vmem:[#allocation3 + $0x30] sm:$0xff] %v919
    %924 = vst [vmem:[#allocation3 + $0x38] sm:$0xff] %v920
    %v925 = vld [vmem:[#allocation2] sm:$0xff]
    %v926 = vld [vmem:[#allocation2 + $0x8] sm:$0xff]
    %v927 = vld [vmem:[#allocation2 + $0x10] sm:$0xff]
    %931 = vrot.lane.b32.xlu0 %v925, 126
    %v932 = vpop.permute.xlu0 %931
    %933 = vrot.lane.b32.xlu0 %v926, 126
    %v934 = vpop.permute.xlu0 %933
    %935 = vrot.lane.b32.xlu0 %v927, 126
    %v936 = vpop.permute.xlu0 %935
    %v937 = vsel %vm180, %v932, %v934
    %v938 = vsel %vm180, %v934, %v936
    %v941 = vsel %vm124, %v937, 0.0
    %v942 = vsel %vm125, %v938, 0.0
    %943 = vst [vmem:[#allocation3 + $0x50] sm:$0xff] %v941
    %944 = vst [vmem:[#allocation3 + $0x58] sm:$0xff] %v942
    %v945 = vld [vmem:[#allocation2] sm:$0xff]
    %v946 = vld [vmem:[#allocation2 + $0x8] sm:$0xff]
    %v947 = vld [vmem:[#allocation2 + $0x10] sm:$0xff]
    %951 = vrot.lane.b32.xlu0 %v945, 112
    %v952 = vpop.permute.xlu0 %951
    %953 = vrot.lane.b32.xlu0 %v946, 112
    %v954 = vpop.permute.xlu0 %953
    %955 = vrot.lane.b32.xlu0 %v947, 112
    %v956 = vpop.permute.xlu0 %955
    %v957 = vsel %vm201, %v952, %v954
    %v958 = vsel %vm201, %v954, %v956
    %v961 = vsel %vm122, %v957, 0.0
    %v962 = vsel %vm123, %v958, 0.0
    %963 = vst [vmem:[#allocation3 + $0x70] sm:$0xff] %v961
    %964 = vst [vmem:[#allocation3 + $0x78] sm:$0xff] %v962
    %v965 = vld [vmem:[#allocation2] sm:$0xff]
    %v966 = vld [vmem:[#allocation2 + $0x8] sm:$0xff]
    %v967 = vld [vmem:[#allocation2 + $0x10] sm:$0xff]
    %971 = vrot.lane.b32.xlu0 %v965, 111
    %v972 = vpop.permute.xlu0 %971
    %973 = vrot.lane.b32.xlu0 %v966, 111
    %v974 = vpop.permute.xlu0 %973
    %975 = vrot.lane.b32.xlu0 %v967, 111
    %v976 = vpop.permute.xlu0 %975
    %v977 = vsel %vm222, %v972, %v974
    %v978 = vsel %vm222, %v974, %v976
    %981 = vst [vmem:[#allocation3 + $0x90] sm:$0xff] %v977
    %982 = vst [vmem:[#allocation3 + $0x98] sm:$0xff] %v978
    %v983 = vld [vmem:[#allocation2] sm:$0xff]
    %v984 = vld [vmem:[#allocation2 + $0x8] sm:$0xff]
    %v985 = vld [vmem:[#allocation2 + $0x10] sm:$0xff]
    %989 = vrot.lane.b32.xlu0 %v983, 110
    %v990 = vpop.permute.xlu0 %989
    %991 = vrot.lane.b32.xlu0 %v984, 110
    %v992 = vpop.permute.xlu0 %991
    %993 = vrot.lane.b32.xlu0 %v985, 110
    %v994 = vpop.permute.xlu0 %993
    %v995 = vsel %vm241, %v990, %v992
    %v996 = vsel %vm241, %v992, %v994
    %v999 = vsel %vm124, %v995, 0.0
    %v1000 = vsel %vm125, %v996, 0.0
    %1001 = vst [vmem:[#allocation3 + $0xb0] sm:$0xff] %v999
    %1002 = vst [vmem:[#allocation3 + $0xb8] sm:$0xff] %v1000
    %v1003 = vld [vmem:[#allocation2] sm:$0xff]
    %v1004 = vld [vmem:[#allocation2 + $0x8] sm:$0xff]
    %v1005 = vld [vmem:[#allocation2 + $0x10] sm:$0xff]
    %1009 = vrot.lane.b32.xlu0 %v1003, 96
    %v1010 = vpop.permute.xlu0 %1009
    %1011 = vrot.lane.b32.xlu0 %v1004, 96
    %v1012 = vpop.permute.xlu0 %1011
    %1013 = vrot.lane.b32.xlu0 %v1005, 96
    %v1014 = vpop.permute.xlu0 %1013
    %v1015 = vsel %vm262, %v1010, %v1012
    %v1016 = vsel %vm262, %v1012, %v1014
    %v1019 = vsel %vm122, %v1015, 0.0
    %v1020 = vsel %vm123, %v1016, 0.0
    %1021 = vst [vmem:[#allocation3 + $0xd0] sm:$0xff] %v1019
    %1022 = vst [vmem:[#allocation3 + $0xd8] sm:$0xff] %v1020
    %v1023 = vld [vmem:[#allocation2] sm:$0xff]
    %v1024 = vld [vmem:[#allocation2 + $0x8] sm:$0xff]
    %v1025 = vld [vmem:[#allocation2 + $0x10] sm:$0xff]
    %1029 = vrot.lane.b32.xlu0 %v1023, 95
    %v1030 = vpop.permute.xlu0 %1029
    %1031 = vrot.lane.b32.xlu0 %v1024, 95
    %v1032 = vpop.permute.xlu0 %1031
    %1033 = vrot.lane.b32.xlu0 %v1025, 95
    %v1034 = vpop.permute.xlu0 %1033
    %v1035 = vsel %vm283, %v1030, %v1032
    %v1036 = vsel %vm283, %v1032, %v1034
    %1039 = vst [vmem:[#allocation3 + $0xf0] sm:$0xff] %v1035
    %1040 = vst [vmem:[#allocation3 + $0xf8] sm:$0xff] %v1036
    %v1041 = vld [vmem:[#allocation2] sm:$0xff]
    %v1042 = vld [vmem:[#allocation2 + $0x8] sm:$0xff]
    %v1043 = vld [vmem:[#allocation2 + $0x10] sm:$0xff]
    %1047 = vrot.lane.b32.xlu0 %v1041, 94
    %v1048 = vpop.permute.xlu0 %1047
    %1049 = vrot.lane.b32.xlu0 %v1042, 94
    %v1050 = vpop.permute.xlu0 %1049
    %1051 = vrot.lane.b32.xlu0 %v1043, 94
    %v1052 = vpop.permute.xlu0 %1051
    %v1053 = vsel %vm302, %v1048, %v1050
    %v1054 = vsel %vm302, %v1050, %v1052
    %v1057 = vsel %vm124, %v1053, 0.0
    %v1058 = vsel %vm125, %v1054, 0.0
    %1059 = vst [vmem:[#allocation3 + $0x110] sm:$0xff] %v1057
    %1060 = vst [vmem:[#allocation3 + $0x118] sm:$0xff] %v1058
    %v1061 = vld [vmem:[%s2] sm:$0xff]
    %v1062 = vld [vmem:[#allocation3] sm:$0xff]
    %v1063 = vld [vmem:[#allocation3 + $0x8] sm:$0xff]
    %v1064 = vld [vmem:[#allocation3 + $0x10] sm:$0xff]
    %v1065 = vld [vmem:[#allocation3 + $0x18] sm:$0xff]
    %v1066 = vld [vmem:[#allocation3 + $0x20] sm:$0xff]
    %v1067 = vld [vmem:[#allocation3 + $0x28] sm:$0xff]
    %v1068 = vld [vmem:[#allocation3 + $0x30] sm:$0xff]
    %v1069 = vld [vmem:[#allocation3 + $0x38] sm:$0xff]
    %v1070 = vld [vmem:[#allocation3 + $0x40] sm:$0xff]
    %v1071 = vld [vmem:[#allocation3 + $0x48] sm:$0xff]
    %v1072 = vld [vmem:[#allocation3 + $0x50] sm:$0xff]
    %v1073 = vld [vmem:[#allocation3 + $0x58] sm:$0xff]
    %v1074 = vld [vmem:[#allocation3 + $0x60] sm:$0xff]
    %v1075 = vld [vmem:[#allocation3 + $0x68] sm:$0xff]
    %v1076 = vld [vmem:[#allocation3 + $0x70] sm:$0xff]
    %v1077 = vld [vmem:[#allocation3 + $0x78] sm:$0xff]
    %v1078 = vld [vmem:[#allocation3 + $0x80] sm:$0xff]
    %v1079 = vld [vmem:[#allocation3 + $0x88] sm:$0xff]
    %v1080 = vld [vmem:[#allocation3 + $0x90] sm:$0xff]
    %v1081 = vld [vmem:[#allocation3 + $0x98] sm:$0xff]
    %v1082 = vld [vmem:[#allocation3 + $0xa0] sm:$0xff]
    %v1083 = vld [vmem:[#allocation3 + $0xa8] sm:$0xff]
    %v1084 = vld [vmem:[#allocation3 + $0xb0] sm:$0xff]
    %v1085 = vld [vmem:[#allocation3 + $0xb8] sm:$0xff]
    %v1086 = vld [vmem:[#allocation3 + $0xc0] sm:$0xff]
    %v1087 = vld [vmem:[#allocation3 + $0xc8] sm:$0xff]
    %v1088 = vld [vmem:[#allocation3 + $0xd0] sm:$0xff]
    %v1089 = vld [vmem:[#allocation3 + $0xd8] sm:$0xff]
    %v1090 = vld [vmem:[#allocation3 + $0xe0] sm:$0xff]
    %v1091 = vld [vmem:[#allocation3 + $0xe8] sm:$0xff]
    %v1092 = vld [vmem:[#allocation3 + $0xf0] sm:$0xff]
    %v1093 = vld [vmem:[#allocation3 + $0xf8] sm:$0xff]
    %v1094 = vld [vmem:[#allocation3 + $0x100] sm:$0xff]
    %v1095 = vld [vmem:[#allocation3 + $0x108] sm:$0xff]
    %v1096 = vld [vmem:[#allocation3 + $0x110] sm:$0xff]
    %v1097 = vld [vmem:[#allocation3 + $0x118] sm:$0xff]
    %1098 = vset.pattern.permute.xlu0 1
    %1099 = vperm.xlu0 %1098, %v126
    %v1100 = vpop.permute.xlu0 %1099
    %v1103 = vsel %vm524, %v1061, 0
    %1105 = vmatprep.subr.mxu0 %v1063
    %1106 = vmatpush1.msra.mxu0 %v1062
    %1107 = vmatprep.subr.mxu0 %v1067
    %1108 = vmatpush1.msra.mxu0 %v1066
    %1109 = vmatprep.subr.mxu0 %v1071
    %1110 = vmatpush1.msra.mxu0 %v1070
    %1111 = vmatprep.subr.mxu0 %v1075
    %1112 = vmatpush1.msra.mxu0 %v1074
    %1113 = vmatprep.subr.mxu0 %v1079
    %1114 = vmatpush1.msra.mxu0 %v1078
    %1115 = vmatprep.subr.mxu0 %v1083
    %1116 = vmatpush1.msra.mxu0 %v1082
    %1117 = vmatprep.subr.mxu0 %v1087
    %1118 = vmatpush1.msra.mxu0 %v1086
    %1119 = vmatprep.subr.mxu0 %v1091
    %1120 = vmatpush1.msra.mxu0 %v1090
    %1121 = vmatprep.subr.mxu0 %v1095
    %1122 = vmatpush1.msra.mxu0 %v1094
    %1123 = vmatprep.subr.mxu0 0.0
    %1124 = vmatpush1.msra.mxu0 0.0
    %1125 = vmatprep.subr.mxu0 0.0
    %1126 = vmatpush1.msra.mxu0 0.0
    %1127 = vmatprep.subr.mxu0 0.0
    %1128 = vmatpush1.msra.mxu0 0.0
    %1129 = vmatprep.subr.mxu0 0.0
    %1130 = vmatpush1.msra.mxu0 0.0
    %1131 = vmatprep.subr.mxu0 0.0
    %1132 = vmatpush1.msra.mxu0 0.0
    %1133 = vmatprep.subr.mxu0 0.0
    %1134 = vmatpush1.msra.mxu0 0.0
    %1135 = vmatprep.subr.mxu0 0.0
    %1136 = vmatpush1.msra.mxu0 0.0
    %1137 = vmatprep.subr.mxu0 0.0
    %1138 = vmatpush1.msra.mxu0 0.0
    %1139 = vmatprep.subr.mxu0 0.0
    %1140 = vmatpush1.msra.mxu0 0.0
    %1141 = vmatprep.subr.mxu0 0.0
    %1142 = vmatpush1.msra.mxu0 0.0
    %1143 = vmatprep.subr.mxu0 0.0
    %1144 = vmatpush1.msra.mxu0 0.0
    %1145 = vmatprep.subr.mxu0 0.0
    %1146 = vmatpush1.msra.mxu0 0.0
    %1147 = vmatprep.subr.mxu0 0.0
    %1148 = vmatpush1.msra.mxu0 0.0
    %1149 = vmatprep.subr.mxu0 0.0
    %1150 = vmatpush1.msra.mxu0 0.0
    %1151 = vmatprep.subr.mxu0 0.0
    %1152 = vmatpush1.msra.mxu0 0.0
    %1153 = vmatprep.subr.mxu0 0.0
    %1154 = vmatpush1.msra.mxu0 0.0
    %1155 = vmatprep.subr.mxu0 0.0
    %1156 = vmatpush1.msra.mxu0 0.0
    %1157 = vmatprep.subr.mxu0 0.0
    %1158 = vmatpush1.msra.mxu0 0.0
    %1159 = vmatprep.subr.mxu0 0.0
    %1160 = vmatpush1.msra.mxu0 0.0
    %1161 = vmatprep.subr.mxu0 0.0
    %1162 = vmatpush1.msra.mxu0 0.0
    %1163 = vmatprep.subr.mxu0 0.0
    %1164 = vmatpush1.msra.mxu0 0.0
    %1165 = vmatprep.subr.mxu0 0.0
    %1166 = vmatpush1.msra.mxu0 0.0
    %1167 = vmatprep.subr.mxu0 0.0
    %1168 = vmatpush1.msra.mxu0 0.0
    %1169 = vmatprep.mubr.f32.mxu0 0.0
    %1170 = vmatmul.mubr.f32.gmra.mrb[0].mxu0 %v1103
    %v1171 = vpop.f32.mrb[0].mxu0
    %v1172 = vadd.f32 %v1100, %v1171
    %v1173 = vpop.f32.mrb[0].mxu0
    %v1174 = vadd.f32 %v1100, %v1173
    %1175 = vdwg.mxu0
    %1176 = vmatprep.subr.mxu0 %v1065
    %1177 = vmatpush1.msra.mxu0 %v1064
    %1178 = vmatprep.subr.mxu0 %v1069
    %1179 = vmatpush1.msra.mxu0 %v1068
    %1180 = vmatprep.subr.mxu0 %v1073
    %1181 = vmatpush1.msra.mxu0 %v1072
    %1182 = vmatprep.subr.mxu0 %v1077
    %1183 = vmatpush1.msra.mxu0 %v1076
    %1184 = vmatprep.subr.mxu0 %v1081
    %1185 = vmatpush1.msra.mxu0 %v1080
    %1186 = vmatprep.subr.mxu0 %v1085
    %1187 = vmatpush1.msra.mxu0 %v1084
    %1188 = vmatprep.subr.mxu0 %v1089
    %1189 = vmatpush1.msra.mxu0 %v1088
    %1190 = vmatprep.subr.mxu0 %v1093
    %1191 = vmatpush1.msra.mxu0 %v1092
    %1192 = vmatprep.subr.mxu0 %v1097
    %1193 = vmatpush1.msra.mxu0 %v1096
    %1194 = vmatprep.subr.mxu0 0.0
    %1195 = vmatpush1.msra.mxu0 0.0
    %1196 = vmatprep.subr.mxu0 0.0
    %1197 = vmatpush1.msra.mxu0 0.0
    %1198 = vmatprep.subr.mxu0 0.0
    %1199 = vmatpush1.msra.mxu0 0.0
    %1200 = vmatprep.subr.mxu0 0.0
    %1201 = vmatpush1.msra.mxu0 0.0
    %1202 = vmatprep.subr.mxu0 0.0
    %1203 = vmatpush1.msra.mxu0 0.0
    %1204 = vmatprep.subr.mxu0 0.0
    %1205 = vmatpush1.msra.mxu0 0.0
    %1206 = vmatprep.subr.mxu0 0.0
    %1207 = vmatpush1.msra.mxu0 0.0
    %1208 = vmatprep.subr.mxu0 0.0
    %1209 = vmatpush1.msra.mxu0 0.0
    %1210 = vmatprep.subr.mxu0 0.0
    %1211 = vmatpush1.msra.mxu0 0.0
    %1212 = vmatprep.subr.mxu0 0.0
    %1213 = vmatpush1.msra.mxu0 0.0
    %1214 = vmatprep.subr.mxu0 0.0
    %1215 = vmatpush1.msra.mxu0 0.0
    %1216 = vmatprep.subr.mxu0 0.0
    %1217 = vmatpush1.msra.mxu0 0.0
    %1218 = vmatprep.subr.mxu0 0.0
    %1219 = vmatpush1.msra.mxu0 0.0
    %1220 = vmatprep.subr.mxu0 0.0
    %1221 = vmatpush1.msra.mxu0 0.0
    %1222 = vmatprep.subr.mxu0 0.0
    %1223 = vmatpush1.msra.mxu0 0.0
    %1224 = vmatprep.subr.mxu0 0.0
    %1225 = vmatpush1.msra.mxu0 0.0
    %1226 = vmatprep.subr.mxu0 0.0
    %1227 = vmatpush1.msra.mxu0 0.0
    %1228 = vmatprep.subr.mxu0 0.0
    %1229 = vmatpush1.msra.mxu0 0.0
    %1230 = vmatprep.subr.mxu0 0.0
    %1231 = vmatpush1.msra.mxu0 0.0
    %1232 = vmatprep.subr.mxu0 0.0
    %1233 = vmatpush1.msra.mxu0 0.0
    %1234 = vmatprep.subr.mxu0 0.0
    %1235 = vmatpush1.msra.mxu0 0.0
    %1236 = vmatprep.subr.mxu0 0.0
    %1237 = vmatpush1.msra.mxu0 0.0
    %1238 = vmatprep.subr.mxu0 0.0
    %1239 = vmatpush1.msra.mxu0 0.0
    %1240 = vmatprep.mubr.f32.mxu0 0.0
    %1241 = vmatmul.mubr.f32.gmra.mrb[0].mxu0 %v1103
    %v1242 = vpop.f32.mrb[0].mxu0
    %v1243 = vadd.f32 %v1100, %v1242
    %v1244 = vpop.f32.mrb[0].mxu0
    %v1245 = vadd.f32 %v1100, %v1244
    %1246 = vdwg.mxu0
    %v1247 = vld [vmem:[%s3] sm:$0xff]
    %v1248 = vld [vmem:[%s4] sm:$0xff]
    %v1249 = vld [vmem:[%s5] sm:$0x1]
    %v1250 = vand.u32 2147483647, %v1172
    %v1251 = vand.u32 2147483647, %v1174
    %v1252 = vadd.f32 %v1250, %v1251
    %1253 = vadd.xlane.f32.xlu0 %v1252
    %v1254 = vpop.xlane.xlu0 %1253
    %v1255 = vrcp.pop 256.0
    %v1256 = vmul.f32 %v1254, %v1255
    %v1257 = vmul.f32 %v1247, %v1256
    %vm1258 = vcmask 64512
    %v1259 = vsel %vm1258, %v1257, 0.0
    %v1260 = vrot.slane %v1259, 4
    %v1261 = vadd.f32 %v1259, %v1260
    %v1262 = vrot.slane %v1261, 2
    %v1263 = vadd.f32 %v1261, %v1262
    %v1264 = vrot.slane %v1263, 1
    %v1265 = vadd.f32 %v1263, %v1264
    %v1266 = vadd.f32 %v1265, %v1249
    %vm1267 = vcmp.ge.f32.partialorder %v1266, 0.0
    %v1268 = vmul.f32 %v1266, 0.2
    %v1269 = vsel %vm1267, %v1266, %v1268
    %v1270 = vlaneseq
    %v1271 = vshrl.u32 %v1270, 7
    %v1272 = vsub.s32 0, %v1271
    %v1273 = vrot.slane %v1269, %v1272
    %v1274 = vmul.f32 %v1248, %v1273
    %v1275 = vsel %vm1258, %v1274, 0.0
    %1276 = vadd.xlane.f32.xlu0 %v1275
    %v1277 = vpop.xlane.xlu0 %1276
    %v1278 = vadd.f32 %v1277, %v126
    %v1279 = vsub.f32 0.0, %v1278
    %v1280 = vmul.f32 %v1279, 1.442695
    %v1281 = vpow.pop %v1280
    %v1282 = vadd.f32 %v1281, 1.0
    %v1283 = vrcp.pop %v1282
    %v1284 = vmul.f32 1.0, %v1283
    %v1285 = vmul.f32 %v1256, %v1284
    %v1286 = vsub.f32 0.0, %v1285
    %1288 = vset.pattern.permute.xlu0 3
    %1289 = vperm.xlu0 %1288, %v1286
    %v1290 = vpop.permute.xlu0 %1289
    %v1292 = vmax.f32 %v1290, %v1172
    %v1293 = vmax.f32 %v1290, %v1174
    %1295 = vset.pattern.permute.xlu0 3
    %1296 = vperm.xlu0 %1295, %v1285
    %v1297 = vpop.permute.xlu0 %1296
    %v1299 = vmin.f32 %v1297, %v1292
    %v1300 = vmin.f32 %v1297, %v1293
    %v1301 = vsub.f32 %v1172, %v1299
    %v1302 = vsub.f32 %v1174, %v1300
    %v1303 = vadd.f32 %v1301, %v710
    %v1304 = vadd.f32 %v1302, %v711
    %vm1305 = vcmp.ge.f32.partialorder %v1303, 0.0
    %vm1306 = vcmp.ge.f32.partialorder %v1304, 0.0
    %v1307 = vmul.f32 %v1303, 0.2
    %v1308 = vmul.f32 %v1304, 0.2
    %v1309 = vsel %vm1305, %v1303, %v1307
    %v1310 = vsel %vm1306, %v1304, %v1308
    %1311 = vst [vmem:[#allocation9] sm:$0xff] %v1309
    %1312 = vst [vmem:[#allocation9 + $0x8] sm:$0xff] %v1310
    %v1313 = vand.u32 2147483647, %v1243
    %v1314 = vand.u32 2147483647, %v1245
    %v1315 = vadd.f32 %v1313, %v1314
    %1316 = vadd.xlane.f32.xlu0 %v1315
    %v1317 = vpop.xlane.xlu0 %1316
    %v1318 = vmul.f32 %v1317, %v1255
    %v1319 = vmul.f32 %v1247, %v1318
    %v1320 = vsel %vm1258, %v1319, 0.0
    %v1321 = vrot.slane %v1320, 4
    %v1322 = vadd.f32 %v1320, %v1321
    %v1323 = vrot.slane %v1322, 2
    %v1324 = vadd.f32 %v1322, %v1323
    %v1325 = vrot.slane %v1324, 1
    %v1326 = vadd.f32 %v1324, %v1325
    %v1327 = vadd.f32 %v1326, %v1249
    %vm1328 = vcmp.ge.f32.partialorder %v1327, 0.0
    %v1329 = vmul.f32 %v1327, 0.2
    %v1330 = vsel %vm1328, %v1327, %v1329
    %v1331 = vlaneseq
    %v1332 = vshrl.u32 %v1331, 7
    %v1333 = vsub.s32 0, %v1332
    %v1334 = vrot.slane %v1330, %v1333
    %v1335 = vmul.f32 %v1248, %v1334
    %v1336 = vsel %vm1258, %v1335, 0.0
    %1337 = vadd.xlane.f32.xlu0 %v1336
    %v1338 = vpop.xlane.xlu0 %1337
    %v1339 = vadd.f32 %v1338, %v126
    %v1340 = vsub.f32 0.0, %v1339
    %v1341 = vmul.f32 %v1340, 1.442695
    %v1342 = vpow.pop %v1341
    %v1343 = vadd.f32 %v1342, 1.0
    %v1344 = vrcp.pop %v1343
    %v1345 = vmul.f32 1.0, %v1344
    %v1346 = vmul.f32 %v1318, %v1345
    %v1347 = vsub.f32 0.0, %v1346
    %1349 = vset.pattern.permute.xlu0 3
    %1350 = vperm.xlu0 %1349, %v1347
    %v1351 = vpop.permute.xlu0 %1350
    %v1353 = vmax.f32 %v1351, %v1243
    %v1354 = vmax.f32 %v1351, %v1245
    %1356 = vset.pattern.permute.xlu0 3
    %1357 = vperm.xlu0 %1356, %v1346
    %v1358 = vpop.permute.xlu0 %1357
    %v1360 = vmin.f32 %v1358, %v1353
    %v1361 = vmin.f32 %v1358, %v1354
    %v1362 = vsub.f32 %v1243, %v1360
    %v1363 = vsub.f32 %v1245, %v1361
    %v1364 = vadd.f32 %v1362, %v712
    %v1365 = vadd.f32 %v1363, %v713
    %vm1366 = vcmp.ge.f32.partialorder %v1364, 0.0
    %vm1367 = vcmp.ge.f32.partialorder %v1365, 0.0
    %v1368 = vmul.f32 %v1364, 0.2
    %v1369 = vmul.f32 %v1365, 0.2
    %v1370 = vsel %vm1366, %v1364, %v1368
    %v1371 = vsel %vm1367, %v1365, %v1369
    %s1372 = scalar_lea.vmem [#allocation9], 16
    %1373 = vst [vmem:[%s1372] sm:$0xff] %v1370
    %1374 = vst [vmem:[%s1372 + $0x8] sm:$0xff] %v1371
    // Predicated region
    $region38: #{tpu_custom_call.1} parent=1 // pred_check
      _
    $region39: #{tpu_custom_call.1} parent=1 // pred_check_branch
      %1376 = sbr.rel (0) target = $region41
    $region40: #{tpu_custom_call.1} parent=1 // pred_region
      %s1378 = ssub.s32 512, 512
      %1379 = vsyncadd [#allocation6], %s1378
      %s1380 = sshll.u32 [#allocation9], 4
      %s1381 = int_to_ptr.vmem [resolvable:$true] %s1380
      %1386 = dma.vmem_to_hbm [thread:$0]  %s1381, 512, %s7, [#allocation6], 256, 256, 16
    $region41: #{tpu_custom_call.1} parent=1 // pred_fallthru
      _
    // Predicated region
    $region42: #{tpu_custom_call.1} parent=1 // pred_check
      _
    $region43: #{tpu_custom_call.1} parent=1 // pred_check_branch
      %1388 = sbr.rel (0) target = $region45
    $region44: #{tpu_custom_call.1} parent=1 // pred_region
      %1389 = dma.done [#allocation6], 512
    $region45: #{tpu_custom_call.1} parent=1 // pred_fallthru
      _
    %1390 = vsyncpa [#allocation5], 1
    %1391 = vsyncpa [#allocation8], 1
    %1392 = vsyncpa [#allocation6], 1

</llo_original>
